<compile_context>
chip_gen: v5e
topology: v5e:2x2
jax: 0.10.0
libtpu: 0.0.40
codegen_flags: <defaults>
</compile_context>

<pallas_src>
import jax
import jax.numpy as jnp
import numpy as np
from jax.experimental import pallas as pl
from jax.experimental.pallas import tpu as pltpu


def _dlight_conv_kernel(x_ref, wt_ref, b_ref, o_ref):
    # x_ref : (tm, S, D)  block of rows in the model dtype (S = win_size**2)
    # wt_ref: (D, S)      f32 Linear weight, pre-transposed and pre-scaled by 1/S
    # b_ref : (1, S)      f32 Linear bias
    # o_ref : (tm, D)
    S = x_ref.shape[1]

    # Pass 1: window sum, one (tm, D) slice at a time (no (tm,S,D) temporary).
    avg_acc = x_ref[:, 0, :].astype(jnp.float32)
    for s in range(1, S):
        avg_acc = avg_acc + x_ref[:, s, :].astype(jnp.float32)

    # Linear: (sum_s x_s) @ (W^T / S) + b   — small MXU matmul, f32 accumulate.
    logits = jnp.dot(avg_acc, wt_ref[...], preferred_element_type=jnp.float32)
    logits = logits + b_ref[...]                                     # (tm, S)

    # Numerically stable softmax over the S window positions.
    m = jnp.max(logits, axis=-1, keepdims=True)
    e = jnp.exp(logits - m)
    inv = pl.reciprocal(jnp.sum(e, axis=-1, keepdims=True), approx=True)
    prob = e * inv                                                   # (tm, S)

    # Pass 2: weighted sum over window positions, accumulated per slice.
    out_acc = prob[:, 0:1] * x_ref[:, 0, :].astype(jnp.float32)
    for s in range(1, S):
        out_acc = out_acc + prob[:, s:s + 1] * x_ref[:, s, :].astype(jnp.float32)

    o_ref[...] = out_acc.astype(o_ref.dtype)


def _round8(n):
    return ((int(n) + 7) // 8) * 8


def _vmem_capacity_bytes():
    try:
        info = pltpu.get_tpu_info()
        cap = getattr(info, "vmem_capacity_bytes", None)
        if cap:
            return int(cap)
    except Exception:
        pass
    return 64 << 20  # conservative fallback (v7x per-TensorCore VMEM)


def _auto_tile_rows(M, S, D, in_itemsize, out_itemsize, budget_bytes):
    # Per-row VMEM: double-buffered input tile + double-buffered output tile
    # + a few f32 accumulators (avg_acc, out_acc, prob/logits, slack).
    per_row = 2 * S * D * in_itemsize + 2 * D * out_itemsize + 4 * D * 4
    resident = 2 * D * S * 4 + 2 * 128 * 4       # weight + bias double-buffers
    tm = max(8, (budget_bytes - resident) // per_row)
    tm = min(512, (tm // 8) * 8)                  # large tiles; cap at 512 rows
    # Feed both v7x TensorCores: aim for >=4 grid steps when M is large enough.
    if M >= 4 * 128:
        tm = min(tm, max(128, _round8(-(-M // 4))))
    # Don't over-allocate for tiny inputs.
    tm = min(tm, max(8, _round8(M)))
    return max(8, tm)


def dlight_conv(x, weight, bias, *, tm=None):
    """DlightConv forward.

    x:      (..., S, D)  with S = win_size**2  (f32 or bf16)
    weight: (S, D)       nn.Linear(dim, win_size**2).weight
    bias:   (S,)         nn.Linear bias
    returns (..., D)
    """
    *lead, S, D = x.shape
    M = int(np.prod(lead)) if lead else 1
    x_flat = x.reshape(M, S, D)

    in_itemsize = x.dtype.itemsize
    out_itemsize = x.dtype.itemsize

    vmem_cap = _vmem_capacity_bytes()
    budget = int(vmem_cap * 0.70)                       # ~45 MiB v7x, ~90 MiB v5e/v6e
    vmem_limit = min(vmem_cap - (4 << 20), budget + (8 << 20))

    if tm is None:
        tm = _auto_tile_rows(M, S, D, in_itemsize, out_itemsize, budget)
    tm = max(8, min(int(tm), max(8, _round8(M))))

    # Fold the 1/S mean scale into the pre-transposed weight; keep params in f32.
    wt = (jnp.transpose(weight) / float(S)).astype(jnp.float32)   # (D, S), VMEM-resident
    b2 = bias.reshape(1, S).astype(jnp.float32)

    cost = pl.CostEstimate(
        flops=int(M * (4 * S * D + 2 * S * D + 8 * S)),
        transcendentals=int(M * (S + 1)),
        bytes_accessed=int(x_flat.size * in_itemsize + M * D * out_itemsize
                           + wt.size * 4 + b2.size * 4),
    )

    out = pl.pallas_call(
        _dlight_conv_kernel,
        out_shape=jax.ShapeDtypeStruct((M, D), x.dtype),
        grid_spec=pltpu.PrefetchScalarGridSpec(
            num_scalar_prefetch=0,
            grid=(pl.cdiv(M, tm),),
            in_specs=[
                # TODO(synk): on v7x, sweep pipeline_mode=pl.Buffered(3) here once
                # tiles get small enough that DMA issue latency peeks out.
                pl.BlockSpec((tm, S, D), lambda i: (i, 0, 0)),
                pl.BlockSpec((D, S), lambda i: (0, 0)),
                pl.BlockSpec((1, S), lambda i: (0, 0)),
            ],
            out_specs=pl.BlockSpec((tm, D), lambda i: (i, 0)),
        ),
        compiler_params=pltpu.CompilerParams(
            dimension_semantics=("parallel",),
            vmem_limit_bytes=int(vmem_limit),
        ),
        cost_estimate=cost,
    )(x_flat, wt, b2)

    return out.reshape(*lead, D)


def _reference(x, weight, bias):
    """Pure-JAX reference matching the PyTorch DlightConv forward."""
    avg = jnp.mean(x, axis=-2)
    logits = avg @ weight.T + bias
    prob = jax.nn.softmax(logits, axis=-1)
    return jnp.sum(x * prob[..., None], axis=-2)


if __name__ == "__main__":
    # Module config: DlightConv(dim, configs) with win_size=4 -> S = 16.
    WIN = 4
    S = WIN * WIN          # 16 window positions
    D = 128                # small, lane-dense test value for `dim`
    B, NW = 2, 9           # batch, number of windows -> M = 18 rows (not /8, not /tm)

    key = jax.random.PRNGKey(0)
    kx, kw, kb = jax.random.split(key, 3)
    x = jax.random.normal(kx, (B, NW, S, D), dtype=jnp.float32)
    # nn.Linear(dim, win*win) init: U(-1/sqrt(dim), 1/sqrt(dim)) for weight & bias.
    bound = 1.0 / np.sqrt(D)
    weight = jax.random.uniform(kw, (S, D), minval=-bound, maxval=bound,
                                dtype=jnp.float32)
    bias = jax.random.uniform(kb, (S,), minval=-bound, maxval=bound,
                              dtype=jnp.float32)

    ref = jax.block_until_ready(_reference(x, weight, bias))

    # Auto-sized tile: single (partial) block covering all 18 rows.
    out = jax.block_until_ready(dlight_conv(x, weight, bias))
    assert out.shape == (B, NW, D), out.shape
    np.testing.assert_allclose(np.asarray(out), np.asarray(ref),
                               atol=2e-3, rtol=2e-3)

    # Small explicit tile: multiple grid steps + masked partial trailing block.
    out2 = jax.block_until_ready(dlight_conv(x, weight, bias, tm=8))
    np.testing.assert_allclose(np.asarray(out2), np.asarray(ref),
                               atol=2e-3, rtol=2e-3)

    print("KERNEL_OK")
</pallas_src>

<mosaic_0001>
module attributes {stable_mosaic.version = 11 : i64} {
  func.func @_dlight_conv_kernel(%arg0: i32, %arg1: memref<24x16x128xf32, #tpu.memory_space<vmem>>, %arg2: memref<128x16xf32, #tpu.memory_space<vmem>>, %arg3: memref<1x16xf32, #tpu.memory_space<vmem>>, %arg4: memref<24x128xf32, #tpu.memory_space<vmem>>) attributes {dimension_semantics = [#tpu.dimension_semantics<parallel>], iteration_bounds = array<i64: 1>, scalar_prefetch = 0 : i64, scratch_operands = 0 : i64, tpu.core_type = #tpu.core_type<tc>, window_params = [{transform_indices = @transform_0, window_bounds = array<i64: 24, 16, 128>}, {pipeline_mode = #tpu.pipeline_mode<synchronous>, transform_indices = @transform_1, window_bounds = array<i64: 128, 16>}, {pipeline_mode = #tpu.pipeline_mode<synchronous>, transform_indices = @transform_2, window_bounds = array<i64: 1, 16>}, {transform_indices = @transform_3, window_bounds = array<i64: 24, 128>}]} {
    %c0 = arith.constant 0 : index
    %c0_0 = arith.constant 0 : index
    %c0_1 = arith.constant 0 : index
    %0 = vector.load %arg1[%c0, %c0_0, %c0_1] : memref<24x16x128xf32, #tpu.memory_space<vmem>>, vector<24x1x128xf32>
    %1 = vector.shape_cast %0 : vector<24x1x128xf32> to vector<24x128xf32>
    %c0_2 = arith.constant 0 : index
    %c1 = arith.constant 1 : index
    %c0_3 = arith.constant 0 : index
    %2 = vector.load %arg1[%c0_2, %c1, %c0_3] : memref<24x16x128xf32, #tpu.memory_space<vmem>>, vector<24x1x128xf32>
    %3 = vector.shape_cast %2 : vector<24x1x128xf32> to vector<24x128xf32>
    %4 = arith.addf %1, %3 : vector<24x128xf32>
    %c0_4 = arith.constant 0 : index
    %c2 = arith.constant 2 : index
    %c0_5 = arith.constant 0 : index
    %5 = vector.load %arg1[%c0_4, %c2, %c0_5] : memref<24x16x128xf32, #tpu.memory_space<vmem>>, vector<24x1x128xf32>
    %6 = vector.shape_cast %5 : vector<24x1x128xf32> to vector<24x128xf32>
    %7 = arith.addf %4, %6 : vector<24x128xf32>
    %c0_6 = arith.constant 0 : index
    %c3 = arith.constant 3 : index
    %c0_7 = arith.constant 0 : index
    %8 = vector.load %arg1[%c0_6, %c3, %c0_7] : memref<24x16x128xf32, #tpu.memory_space<vmem>>, vector<24x1x128xf32>
    %9 = vector.shape_cast %8 : vector<24x1x128xf32> to vector<24x128xf32>
    %10 = arith.addf %7, %9 : vector<24x128xf32>
    %c0_8 = arith.constant 0 : index
    %c4 = arith.constant 4 : index
    %c0_9 = arith.constant 0 : index
    %11 = vector.load %arg1[%c0_8, %c4, %c0_9] : memref<24x16x128xf32, #tpu.memory_space<vmem>>, vector<24x1x128xf32>
    %12 = vector.shape_cast %11 : vector<24x1x128xf32> to vector<24x128xf32>
    %13 = arith.addf %10, %12 : vector<24x128xf32>
    %c0_10 = arith.constant 0 : index
    %c5 = arith.constant 5 : index
    %c0_11 = arith.constant 0 : index
    %14 = vector.load %arg1[%c0_10, %c5, %c0_11] : memref<24x16x128xf32, #tpu.memory_space<vmem>>, vector<24x1x128xf32>
    %15 = vector.shape_cast %14 : vector<24x1x128xf32> to vector<24x128xf32>
    %16 = arith.addf %13, %15 : vector<24x128xf32>
    %c0_12 = arith.constant 0 : index
    %c6 = arith.constant 6 : index
    %c0_13 = arith.constant 0 : index
    %17 = vector.load %arg1[%c0_12, %c6, %c0_13] : memref<24x16x128xf32, #tpu.memory_space<vmem>>, vector<24x1x128xf32>
    %18 = vector.shape_cast %17 : vector<24x1x128xf32> to vector<24x128xf32>
    %19 = arith.addf %16, %18 : vector<24x128xf32>
    %c0_14 = arith.constant 0 : index
    %c7 = arith.constant 7 : index
    %c0_15 = arith.constant 0 : index
    %20 = vector.load %arg1[%c0_14, %c7, %c0_15] : memref<24x16x128xf32, #tpu.memory_space<vmem>>, vector<24x1x128xf32>
    %21 = vector.shape_cast %20 : vector<24x1x128xf32> to vector<24x128xf32>
    %22 = arith.addf %19, %21 : vector<24x128xf32>
    %c0_16 = arith.constant 0 : index
    %c8 = arith.constant 8 : index
    %c0_17 = arith.constant 0 : index
    %23 = vector.load %arg1[%c0_16, %c8, %c0_17] : memref<24x16x128xf32, #tpu.memory_space<vmem>>, vector<24x1x128xf32>
    %24 = vector.shape_cast %23 : vector<24x1x128xf32> to vector<24x128xf32>
    %25 = arith.addf %22, %24 : vector<24x128xf32>
    %c0_18 = arith.constant 0 : index
    %c9 = arith.constant 9 : index
    %c0_19 = arith.constant 0 : index
    %26 = vector.load %arg1[%c0_18, %c9, %c0_19] : memref<24x16x128xf32, #tpu.memory_space<vmem>>, vector<24x1x128xf32>
    %27 = vector.shape_cast %26 : vector<24x1x128xf32> to vector<24x128xf32>
    %28 = arith.addf %25, %27 : vector<24x128xf32>
    %c0_20 = arith.constant 0 : index
    %c10 = arith.constant 10 : index
    %c0_21 = arith.constant 0 : index
    %29 = vector.load %arg1[%c0_20, %c10, %c0_21] : memref<24x16x128xf32, #tpu.memory_space<vmem>>, vector<24x1x128xf32>
    %30 = vector.shape_cast %29 : vector<24x1x128xf32> to vector<24x128xf32>
    %31 = arith.addf %28, %30 : vector<24x128xf32>
    %c0_22 = arith.constant 0 : index
    %c11 = arith.constant 11 : index
    %c0_23 = arith.constant 0 : index
    %32 = vector.load %arg1[%c0_22, %c11, %c0_23] : memref<24x16x128xf32, #tpu.memory_space<vmem>>, vector<24x1x128xf32>
    %33 = vector.shape_cast %32 : vector<24x1x128xf32> to vector<24x128xf32>
    %34 = arith.addf %31, %33 : vector<24x128xf32>
    %c0_24 = arith.constant 0 : index
    %c12 = arith.constant 12 : index
    %c0_25 = arith.constant 0 : index
    %35 = vector.load %arg1[%c0_24, %c12, %c0_25] : memref<24x16x128xf32, #tpu.memory_space<vmem>>, vector<24x1x128xf32>
    %36 = vector.shape_cast %35 : vector<24x1x128xf32> to vector<24x128xf32>
    %37 = arith.addf %34, %36 : vector<24x128xf32>
    %c0_26 = arith.constant 0 : index
    %c13 = arith.constant 13 : index
    %c0_27 = arith.constant 0 : index
    %38 = vector.load %arg1[%c0_26, %c13, %c0_27] : memref<24x16x128xf32, #tpu.memory_space<vmem>>, vector<24x1x128xf32>
    %39 = vector.shape_cast %38 : vector<24x1x128xf32> to vector<24x128xf32>
    %40 = arith.addf %37, %39 : vector<24x128xf32>
    %c0_28 = arith.constant 0 : index
    %c14 = arith.constant 14 : index
    %c0_29 = arith.constant 0 : index
    %41 = vector.load %arg1[%c0_28, %c14, %c0_29] : memref<24x16x128xf32, #tpu.memory_space<vmem>>, vector<24x1x128xf32>
    %42 = vector.shape_cast %41 : vector<24x1x128xf32> to vector<24x128xf32>
    %43 = arith.addf %40, %42 : vector<24x128xf32>
    %c0_30 = arith.constant 0 : index
    %c15 = arith.constant 15 : index
    %c0_31 = arith.constant 0 : index
    %44 = vector.load %arg1[%c0_30, %c15, %c0_31] : memref<24x16x128xf32, #tpu.memory_space<vmem>>, vector<24x1x128xf32>
    %45 = vector.shape_cast %44 : vector<24x1x128xf32> to vector<24x128xf32>
    %46 = arith.addf %43, %45 : vector<24x128xf32>
    %c0_32 = arith.constant 0 : index
    %c0_33 = arith.constant 0 : index
    %47 = vector.load %arg2[%c0_32, %c0_33] : memref<128x16xf32, #tpu.memory_space<vmem>>, vector<128x16xf32>
    %cst = arith.constant dense<0.000000e+00> : vector<24x16xf32>
    %48 = tpu.matmul %46, %47, %cst {dimension_numbers = #tpu.dot_dimension_numbers<[1], [0], [0], [1], [0, 0, 1, 1], [], []>} : vector<24x128xf32>, vector<128x16xf32>, vector<24x16xf32> -> vector<24x16xf32>
    %c0_34 = arith.constant 0 : index
    %c0_35 = arith.constant 0 : index
    %49 = vector.load %arg3[%c0_34, %c0_35] : memref<1x16xf32, #tpu.memory_space<vmem>>, vector<1x16xf32>
    %50 = vector.broadcast %49 : vector<1x16xf32> to vector<24x16xf32>
    %51 = arith.addf %48, %50 : vector<24x16xf32>
    %cst_36 = arith.constant dense<0xFF800000> : vector<24xf32>
    %52 = vector.multi_reduction <maximumf>, %51, %cst_36 [1] : vector<24x16xf32> to vector<24xf32>
    %53 = vector.shape_cast %52 : vector<24xf32> to vector<24x1xf32>
    %54 = vector.broadcast %53 : vector<24x1xf32> to vector<24x16xf32>
    %55 = arith.subf %51, %54 : vector<24x16xf32>
    %56 = math.exp %55 : vector<24x16xf32>
    %cst_37 = arith.constant dense<0.000000e+00> : vector<24xf32>
    %57 = vector.multi_reduction <add>, %56, %cst_37 [1] : vector<24x16xf32> to vector<24xf32>
    %58 = vector.shape_cast %57 : vector<24xf32> to vector<24x1xf32>
    %59 = tpu.reciprocal %58 {approx = true} : vector<24x1xf32> -> vector<24x1xf32>
    %60 = vector.broadcast %59 : vector<24x1xf32> to vector<24x16xf32>
    %61 = arith.mulf %56, %60 : vector<24x16xf32>
    %62 = vector.extract_strided_slice %61 {offsets = [0, 0], sizes = [24, 1], strides = [1, 1]} : vector<24x16xf32> to vector<24x1xf32>
    %c0_38 = arith.constant 0 : index
    %c0_39 = arith.constant 0 : index
    %c0_40 = arith.constant 0 : index
    %63 = vector.load %arg1[%c0_38, %c0_39, %c0_40] : memref<24x16x128xf32, #tpu.memory_space<vmem>>, vector<24x1x128xf32>
    %64 = vector.shape_cast %63 : vector<24x1x128xf32> to vector<24x128xf32>
    %65 = vector.broadcast %62 : vector<24x1xf32> to vector<24x128xf32>
    %66 = arith.mulf %65, %64 : vector<24x128xf32>
    %67 = vector.extract_strided_slice %61 {offsets = [0, 1], sizes = [24, 1], strides = [1, 1]} : vector<24x16xf32> to vector<24x1xf32>
    %c0_41 = arith.constant 0 : index
    %c1_42 = arith.constant 1 : index
    %c0_43 = arith.constant 0 : index
    %68 = vector.load %arg1[%c0_41, %c1_42, %c0_43] : memref<24x16x128xf32, #tpu.memory_space<vmem>>, vector<24x1x128xf32>
    %69 = vector.shape_cast %68 : vector<24x1x128xf32> to vector<24x128xf32>
    %70 = vector.broadcast %67 : vector<24x1xf32> to vector<24x128xf32>
    %71 = arith.mulf %70, %69 : vector<24x128xf32>
    %72 = arith.addf %66, %71 : vector<24x128xf32>
    %73 = vector.extract_strided_slice %61 {offsets = [0, 2], sizes = [24, 1], strides = [1, 1]} : vector<24x16xf32> to vector<24x1xf32>
    %c0_44 = arith.constant 0 : index
    %c2_45 = arith.constant 2 : index
    %c0_46 = arith.constant 0 : index
    %74 = vector.load %arg1[%c0_44, %c2_45, %c0_46] : memref<24x16x128xf32, #tpu.memory_space<vmem>>, vector<24x1x128xf32>
    %75 = vector.shape_cast %74 : vector<24x1x128xf32> to vector<24x128xf32>
    %76 = vector.broadcast %73 : vector<24x1xf32> to vector<24x128xf32>
    %77 = arith.mulf %76, %75 : vector<24x128xf32>
    %78 = arith.addf %72, %77 : vector<24x128xf32>
    %79 = vector.extract_strided_slice %61 {offsets = [0, 3], sizes = [24, 1], strides = [1, 1]} : vector<24x16xf32> to vector<24x1xf32>
    %c0_47 = arith.constant 0 : index
    %c3_48 = arith.constant 3 : index
    %c0_49 = arith.constant 0 : index
    %80 = vector.load %arg1[%c0_47, %c3_48, %c0_49] : memref<24x16x128xf32, #tpu.memory_space<vmem>>, vector<24x1x128xf32>
    %81 = vector.shape_cast %80 : vector<24x1x128xf32> to vector<24x128xf32>
    %82 = vector.broadcast %79 : vector<24x1xf32> to vector<24x128xf32>
    %83 = arith.mulf %82, %81 : vector<24x128xf32>
    %84 = arith.addf %78, %83 : vector<24x128xf32>
    %85 = vector.extract_strided_slice %61 {offsets = [0, 4], sizes = [24, 1], strides = [1, 1]} : vector<24x16xf32> to vector<24x1xf32>
    %c0_50 = arith.constant 0 : index
    %c4_51 = arith.constant 4 : index
    %c0_52 = arith.constant 0 : index
    %86 = vector.load %arg1[%c0_50, %c4_51, %c0_52] : memref<24x16x128xf32, #tpu.memory_space<vmem>>, vector<24x1x128xf32>
    %87 = vector.shape_cast %86 : vector<24x1x128xf32> to vector<24x128xf32>
    %88 = vector.broadcast %85 : vector<24x1xf32> to vector<24x128xf32>
    %89 = arith.mulf %88, %87 : vector<24x128xf32>
    %90 = arith.addf %84, %89 : vector<24x128xf32>
    %91 = vector.extract_strided_slice %61 {offsets = [0, 5], sizes = [24, 1], strides = [1, 1]} : vector<24x16xf32> to vector<24x1xf32>
    %c0_53 = arith.constant 0 : index
    %c5_54 = arith.constant 5 : index
    %c0_55 = arith.constant 0 : index
    %92 = vector.load %arg1[%c0_53, %c5_54, %c0_55] : memref<24x16x128xf32, #tpu.memory_space<vmem>>, vector<24x1x128xf32>
    %93 = vector.shape_cast %92 : vector<24x1x128xf32> to vector<24x128xf32>
    %94 = vector.broadcast %91 : vector<24x1xf32> to vector<24x128xf32>
    %95 = arith.mulf %94, %93 : vector<24x128xf32>
    %96 = arith.addf %90, %95 : vector<24x128xf32>
    %97 = vector.extract_strided_slice %61 {offsets = [0, 6], sizes = [24, 1], strides = [1, 1]} : vector<24x16xf32> to vector<24x1xf32>
    %c0_56 = arith.constant 0 : index
    %c6_57 = arith.constant 6 : index
    %c0_58 = arith.constant 0 : index
    %98 = vector.load %arg1[%c0_56, %c6_57, %c0_58] : memref<24x16x128xf32, #tpu.memory_space<vmem>>, vector<24x1x128xf32>
    %99 = vector.shape_cast %98 : vector<24x1x128xf32> to vector<24x128xf32>
    %100 = vector.broadcast %97 : vector<24x1xf32> to vector<24x128xf32>
    %101 = arith.mulf %100, %99 : vector<24x128xf32>
    %102 = arith.addf %96, %101 : vector<24x128xf32>
    %103 = vector.extract_strided_slice %61 {offsets = [0, 7], sizes = [24, 1], strides = [1, 1]} : vector<24x16xf32> to vector<24x1xf32>
    %c0_59 = arith.constant 0 : index
    %c7_60 = arith.constant 7 : index
    %c0_61 = arith.constant 0 : index
    %104 = vector.load %arg1[%c0_59, %c7_60, %c0_61] : memref<24x16x128xf32, #tpu.memory_space<vmem>>, vector<24x1x128xf32>
    %105 = vector.shape_cast %104 : vector<24x1x128xf32> to vector<24x128xf32>
    %106 = vector.broadcast %103 : vector<24x1xf32> to vector<24x128xf32>
    %107 = arith.mulf %106, %105 : vector<24x128xf32>
    %108 = arith.addf %102, %107 : vector<24x128xf32>
    %109 = vector.extract_strided_slice %61 {offsets = [0, 8], sizes = [24, 1], strides = [1, 1]} : vector<24x16xf32> to vector<24x1xf32>
    %c0_62 = arith.constant 0 : index
    %c8_63 = arith.constant 8 : index
    %c0_64 = arith.constant 0 : index
    %110 = vector.load %arg1[%c0_62, %c8_63, %c0_64] : memref<24x16x128xf32, #tpu.memory_space<vmem>>, vector<24x1x128xf32>
    %111 = vector.shape_cast %110 : vector<24x1x128xf32> to vector<24x128xf32>
    %112 = vector.broadcast %109 : vector<24x1xf32> to vector<24x128xf32>
    %113 = arith.mulf %112, %111 : vector<24x128xf32>
    %114 = arith.addf %108, %113 : vector<24x128xf32>
    %115 = vector.extract_strided_slice %61 {offsets = [0, 9], sizes = [24, 1], strides = [1, 1]} : vector<24x16xf32> to vector<24x1xf32>
    %c0_65 = arith.constant 0 : index
    %c9_66 = arith.constant 9 : index
    %c0_67 = arith.constant 0 : index
    %116 = vector.load %arg1[%c0_65, %c9_66, %c0_67] : memref<24x16x128xf32, #tpu.memory_space<vmem>>, vector<24x1x128xf32>
    %117 = vector.shape_cast %116 : vector<24x1x128xf32> to vector<24x128xf32>
    %118 = vector.broadcast %115 : vector<24x1xf32> to vector<24x128xf32>
    %119 = arith.mulf %118, %117 : vector<24x128xf32>
    %120 = arith.addf %114, %119 : vector<24x128xf32>
    %121 = vector.extract_strided_slice %61 {offsets = [0, 10], sizes = [24, 1], strides = [1, 1]} : vector<24x16xf32> to vector<24x1xf32>
    %c0_68 = arith.constant 0 : index
    %c10_69 = arith.constant 10 : index
    %c0_70 = arith.constant 0 : index
    %122 = vector.load %arg1[%c0_68, %c10_69, %c0_70] : memref<24x16x128xf32, #tpu.memory_space<vmem>>, vector<24x1x128xf32>
    %123 = vector.shape_cast %122 : vector<24x1x128xf32> to vector<24x128xf32>
    %124 = vector.broadcast %121 : vector<24x1xf32> to vector<24x128xf32>
    %125 = arith.mulf %124, %123 : vector<24x128xf32>
    %126 = arith.addf %120, %125 : vector<24x128xf32>
    %127 = vector.extract_strided_slice %61 {offsets = [0, 11], sizes = [24, 1], strides = [1, 1]} : vector<24x16xf32> to vector<24x1xf32>
    %c0_71 = arith.constant 0 : index
    %c11_72 = arith.constant 11 : index
    %c0_73 = arith.constant 0 : index
    %128 = vector.load %arg1[%c0_71, %c11_72, %c0_73] : memref<24x16x128xf32, #tpu.memory_space<vmem>>, vector<24x1x128xf32>
    %129 = vector.shape_cast %128 : vector<24x1x128xf32> to vector<24x128xf32>
    %130 = vector.broadcast %127 : vector<24x1xf32> to vector<24x128xf32>
    %131 = arith.mulf %130, %129 : vector<24x128xf32>
    %132 = arith.addf %126, %131 : vector<24x128xf32>
    %133 = vector.extract_strided_slice %61 {offsets = [0, 12], sizes = [24, 1], strides = [1, 1]} : vector<24x16xf32> to vector<24x1xf32>
    %c0_74 = arith.constant 0 : index
    %c12_75 = arith.constant 12 : index
    %c0_76 = arith.constant 0 : index
    %134 = vector.load %arg1[%c0_74, %c12_75, %c0_76] : memref<24x16x128xf32, #tpu.memory_space<vmem>>, vector<24x1x128xf32>
    %135 = vector.shape_cast %134 : vector<24x1x128xf32> to vector<24x128xf32>
    %136 = vector.broadcast %133 : vector<24x1xf32> to vector<24x128xf32>
    %137 = arith.mulf %136, %135 : vector<24x128xf32>
    %138 = arith.addf %132, %137 : vector<24x128xf32>
    %139 = vector.extract_strided_slice %61 {offsets = [0, 13], sizes = [24, 1], strides = [1, 1]} : vector<24x16xf32> to vector<24x1xf32>
    %c0_77 = arith.constant 0 : index
    %c13_78 = arith.constant 13 : index
    %c0_79 = arith.constant 0 : index
    %140 = vector.load %arg1[%c0_77, %c13_78, %c0_79] : memref<24x16x128xf32, #tpu.memory_space<vmem>>, vector<24x1x128xf32>
    %141 = vector.shape_cast %140 : vector<24x1x128xf32> to vector<24x128xf32>
    %142 = vector.broadcast %139 : vector<24x1xf32> to vector<24x128xf32>
    %143 = arith.mulf %142, %141 : vector<24x128xf32>
    %144 = arith.addf %138, %143 : vector<24x128xf32>
    %145 = vector.extract_strided_slice %61 {offsets = [0, 14], sizes = [24, 1], strides = [1, 1]} : vector<24x16xf32> to vector<24x1xf32>
    %c0_80 = arith.constant 0 : index
    %c14_81 = arith.constant 14 : index
    %c0_82 = arith.constant 0 : index
    %146 = vector.load %arg1[%c0_80, %c14_81, %c0_82] : memref<24x16x128xf32, #tpu.memory_space<vmem>>, vector<24x1x128xf32>
    %147 = vector.shape_cast %146 : vector<24x1x128xf32> to vector<24x128xf32>
    %148 = vector.broadcast %145 : vector<24x1xf32> to vector<24x128xf32>
    %149 = arith.mulf %148, %147 : vector<24x128xf32>
    %150 = arith.addf %144, %149 : vector<24x128xf32>
    %151 = vector.extract_strided_slice %61 {offsets = [0, 15], sizes = [24, 1], strides = [1, 1]} : vector<24x16xf32> to vector<24x1xf32>
    %c0_83 = arith.constant 0 : index
    %c15_84 = arith.constant 15 : index
    %c0_85 = arith.constant 0 : index
    %152 = vector.load %arg1[%c0_83, %c15_84, %c0_85] : memref<24x16x128xf32, #tpu.memory_space<vmem>>, vector<24x1x128xf32>
    %153 = vector.shape_cast %152 : vector<24x1x128xf32> to vector<24x128xf32>
    %154 = vector.broadcast %151 : vector<24x1xf32> to vector<24x128xf32>
    %155 = arith.mulf %154, %153 : vector<24x128xf32>
    %156 = arith.addf %150, %155 : vector<24x128xf32>
    %c0_86 = arith.constant 0 : index
    %c0_87 = arith.constant 0 : index
    %157 = vector.load %arg4[%c0_86, %c0_87] : memref<24x128xf32, #tpu.memory_space<vmem>>, vector<24x128xf32>
    tpu.vector_store %arg4[%c0_86, %c0_87], %156 {strides = array<i32>} : memref<24x128xf32, #tpu.memory_space<vmem>>, vector<24x128xf32>,
    return
  }
  func.func @transform_0(%arg0: i32) -> (i32, i32, i32) {
    %c0_i32 = arith.constant 0 : i32
    %c0_i32_0 = arith.constant 0 : i32
    %c0_i32_1 = arith.constant 0 : i32
    return %arg0, %c0_i32, %c0_i32_0 : i32, i32, i32
  }
  func.func @transform_1(%arg0: i32) -> (i32, i32) {
    %c0_i32 = arith.constant 0 : i32
    %c0_i32_0 = arith.constant 0 : i32
    %c0_i32_1 = arith.constant 0 : i32
    return %c0_i32, %c0_i32_0 : i32, i32
  }
  func.func @transform_2(%arg0: i32) -> (i32, i32) {
    %c0_i32 = arith.constant 0 : i32
    %c0_i32_0 = arith.constant 0 : i32
    %c0_i32_1 = arith.constant 0 : i32
    return %c0_i32, %c0_i32_0 : i32, i32
  }
  func.func @transform_3(%arg0: i32) -> (i32, i32) {
    %c0_i32 = arith.constant 0 : i32
    %c0_i32_0 = arith.constant 0 : i32
    return %arg0, %c0_i32 : i32, i32
  }
}

</mosaic_0001>

<llo_original>
// kernel: tpu_custom_call.1
$region0: #{tpu_custom_call.1}
  #allocation0 [shape = 'u32[]', space=smem, size = 0x4, offset = 0x4, fixed_abs, tag = 'smem constant byte address 0x4 - core index']
  #allocation1 [shape = 'u32[72,128]{1,0:T(1,128)}', space=vmem, size = 0x9000, scoped, tag = 'internal scratch']
  %s0 = inlined_call_operand.hbm [shape: f32[18,16,128], index: 0, kind: input, shape index: {}]
  %s1 = inlined_call_operand.vmem [shape: f32[128,16], index: 1, kind: input, shape index: {}]
  %s2 = inlined_call_operand.vmem [shape: f32[1,16], index: 2, kind: input, shape index: {}]
  %s3 = inlined_call_operand.hbm [shape: f32[18,128], index: 3, kind: output, shape index: {}]
  %s4 = sld [smem:[#allocation0]]
  $region26: #{tpu_custom_call.1} parent=0
    _
  %s6 = ssub.s32 1, %s4
  %s7 = scalar_select 0, %s6, %s4
  $region1: #{tpu_custom_call.1} parent=0
    #allocation2 [shape = 'u8[196608]{0}', space=vmem, size = 0x30000, scoped, tag = 'input window, operand 0, single buffered']
    #allocation3 [shape = 's32[1]{0}', space=sflag, size = 0x4, scoped, tag = 'scoped memory for tpu_custom_call.1']
    #allocation4 [shape = 's32[1]{0}', space=sflag, size = 0x4, scoped, tag = 'scoped memory for tpu_custom_call.1']
    #allocation5 [shape = 'u8[12288]{0}', space=vmem, size = 0x3000, scoped, tag = 'output window, operand 0, single buffered']
    %8 = vsyncpa [#allocation3], 0
    %9 = vsyncpa [#allocation4], 0
    // Predicated region
    $region2: #{tpu_custom_call.1} parent=1 // pred_check
      _
    $region3: #{tpu_custom_call.1} parent=1 // pred_check_branch
      %11 = sbr.rel (0) target = $region5
    $region4: #{tpu_custom_call.1} parent=1 // pred_region
      %13 = vsyncadd [#allocation3], 1536
      %s14 = sshll.u32 %s0, 4
      %s15 = int_to_ptr.hbm [resolvable:$true] %s14
      %s16 = sshll.u32 [#allocation2], 4
      %s17 = int_to_ptr.vmem [resolvable:$true] %s16
      %22 = dma.hbm_to_vmem [thread:$0]  %s15, 4608, %s17, [#allocation3], 128, 128, 8
    $region5: #{tpu_custom_call.1} parent=1 // pred_fallthru
      _
    // Predicated region
    $region6: #{tpu_custom_call.1} parent=1 // pred_check
      _
    $region7: #{tpu_custom_call.1} parent=1 // pred_check_branch
      %24 = sbr.rel (0) target = $region9
    $region8: #{tpu_custom_call.1} parent=1 // pred_region
      _
    $region9: #{tpu_custom_call.1} parent=1 // pred_fallthru
      _
    // Predicated region
    $region10: #{tpu_custom_call.1} parent=1 // pred_check
      _
    $region11: #{tpu_custom_call.1} parent=1 // pred_check_branch
      %26 = sbr.rel (0) target = $region13
    $region12: #{tpu_custom_call.1} parent=1 // pred_region
      _
    $region13: #{tpu_custom_call.1} parent=1 // pred_fallthru
      _
    // Predicated region
    $region14: #{tpu_custom_call.1} parent=1 // pred_check
      _
    $region15: #{tpu_custom_call.1} parent=1 // pred_check_branch
      %28 = sbr.rel (0) target = $region17
    $region16: #{tpu_custom_call.1} parent=1 // pred_region
      %30 = dma.done [#allocation3], 6144
    $region17: #{tpu_custom_call.1} parent=1 // pred_fallthru
      _
    %v31 = vld [vmem:[#allocation2] sm:$0x1]
    %v32 = vld [vmem:[#allocation2 + $0x10] sm:$0x1]
    %v33 = vld [vmem:[#allocation2 + $0x20] sm:$0x1]
    %v34 = vld [vmem:[#allocation2 + $0x30] sm:$0x1]
    %v35 = vld [vmem:[#allocation2 + $0x40] sm:$0x1]
    %v36 = vld [vmem:[#allocation2 + $0x50] sm:$0x1]
    %v37 = vld [vmem:[#allocation2 + $0x60] sm:$0x1]
    %v38 = vld [vmem:[#allocation2 + $0x70] sm:$0x1]
    %v39 = vld [vmem:[#allocation2 + $0x80] sm:$0x1]
    %v40 = vld [vmem:[#allocation2 + $0x90] sm:$0x1]
    %v41 = vld [vmem:[#allocation2 + $0xa0] sm:$0x1]
    %v42 = vld [vmem:[#allocation2 + $0xb0] sm:$0x1]
    %v43 = vld [vmem:[#allocation2 + $0xc0] sm:$0x1]
    %v44 = vld [vmem:[#allocation2 + $0xd0] sm:$0x1]
    %v45 = vld [vmem:[#allocation2 + $0xe0] sm:$0x1]
    %v46 = vld [vmem:[#allocation2 + $0xf0] sm:$0x1]
    %v47 = vld [vmem:[#allocation2 + $0x100] sm:$0x1]
    %v48 = vld [vmem:[#allocation2 + $0x110] sm:$0x1]
    %v49 = vld [vmem:[#allocation2 + $0x120] sm:$0x1]
    %v50 = vld [vmem:[#allocation2 + $0x130] sm:$0x1]
    %v51 = vld [vmem:[#allocation2 + $0x140] sm:$0x1]
    %v52 = vld [vmem:[#allocation2 + $0x150] sm:$0x1]
    %v53 = vld [vmem:[#allocation2 + $0x160] sm:$0x1]
    %v54 = vld [vmem:[#allocation2 + $0x170] sm:$0x1]
    %v55 = vld [vmem:[#allocation2 + $0x1] sm:$0x1]
    %v56 = vld [vmem:[#allocation2 + $0x11] sm:$0x1]
    %v57 = vld [vmem:[#allocation2 + $0x21] sm:$0x1]
    %v58 = vld [vmem:[#allocation2 + $0x31] sm:$0x1]
    %v59 = vld [vmem:[#allocation2 + $0x41] sm:$0x1]
    %v60 = vld [vmem:[#allocation2 + $0x51] sm:$0x1]
    %v61 = vld [vmem:[#allocation2 + $0x61] sm:$0x1]
    %v62 = vld [vmem:[#allocation2 + $0x71] sm:$0x1]
    %v63 = vld [vmem:[#allocation2 + $0x81] sm:$0x1]
    %v64 = vld [vmem:[#allocation2 + $0x91] sm:$0x1]
    %v65 = vld [vmem:[#allocation2 + $0xa1] sm:$0x1]
    %v66 = vld [vmem:[#allocation2 + $0xb1] sm:$0x1]
    %v67 = vld [vmem:[#allocation2 + $0xc1] sm:$0x1]
    %v68 = vld [vmem:[#allocation2 + $0xd1] sm:$0x1]
    %v69 = vld [vmem:[#allocation2 + $0xe1] sm:$0x1]
    %v70 = vld [vmem:[#allocation2 + $0xf1] sm:$0x1]
    %v71 = vld [vmem:[#allocation2 + $0x101] sm:$0x1]
    %v72 = vld [vmem:[#allocation2 + $0x111] sm:$0x1]
    %v73 = vld [vmem:[#allocation2 + $0x121] sm:$0x1]
    %v74 = vld [vmem:[#allocation2 + $0x131] sm:$0x1]
    %v75 = vld [vmem:[#allocation2 + $0x141] sm:$0x1]
    %v76 = vld [vmem:[#allocation2 + $0x151] sm:$0x1]
    %v77 = vld [vmem:[#allocation2 + $0x161] sm:$0x1]
    %v78 = vld [vmem:[#allocation2 + $0x171] sm:$0x1]
    %v79 = vadd.f32 %v31, %v55
    %v80 = vadd.f32 %v32, %v56
    %v81 = vadd.f32 %v33, %v57
    %v82 = vadd.f32 %v34, %v58
    %v83 = vadd.f32 %v35, %v59
    %v84 = vadd.f32 %v36, %v60
    %v85 = vadd.f32 %v37, %v61
    %v86 = vadd.f32 %v38, %v62
    %v87 = vadd.f32 %v39, %v63
    %v88 = vadd.f32 %v40, %v64
    %v89 = vadd.f32 %v41, %v65
    %v90 = vadd.f32 %v42, %v66
    %v91 = vadd.f32 %v43, %v67
    %v92 = vadd.f32 %v44, %v68
    %v93 = vadd.f32 %v45, %v69
    %v94 = vadd.f32 %v46, %v70
    %v95 = vadd.f32 %v47, %v71
    %v96 = vadd.f32 %v48, %v72
    %v97 = vadd.f32 %v49, %v73
    %v98 = vadd.f32 %v50, %v74
    %v99 = vadd.f32 %v51, %v75
    %v100 = vadd.f32 %v52, %v76
    %v101 = vadd.f32 %v53, %v77
    %v102 = vadd.f32 %v54, %v78
    %v103 = vld [vmem:[#allocation2 + $0x2] sm:$0x1]
    %v104 = vld [vmem:[#allocation2 + $0x12] sm:$0x1]
    %v105 = vld [vmem:[#allocation2 + $0x22] sm:$0x1]
    %v106 = vld [vmem:[#allocation2 + $0x32] sm:$0x1]
    %v107 = vld [vmem:[#allocation2 + $0x42] sm:$0x1]
    %v108 = vld [vmem:[#allocation2 + $0x52] sm:$0x1]
    %v109 = vld [vmem:[#allocation2 + $0x62] sm:$0x1]
    %v110 = vld [vmem:[#allocation2 + $0x72] sm:$0x1]
    %v111 = vld [vmem:[#allocation2 + $0x82] sm:$0x1]
    %v112 = vld [vmem:[#allocation2 + $0x92] sm:$0x1]
    %v113 = vld [vmem:[#allocation2 + $0xa2] sm:$0x1]
    %v114 = vld [vmem:[#allocation2 + $0xb2] sm:$0x1]
    %v115 = vld [vmem:[#allocation2 + $0xc2] sm:$0x1]
    %v116 = vld [vmem:[#allocation2 + $0xd2] sm:$0x1]
    %v117 = vld [vmem:[#allocation2 + $0xe2] sm:$0x1]
    %v118 = vld [vmem:[#allocation2 + $0xf2] sm:$0x1]
    %v119 = vld [vmem:[#allocation2 + $0x102] sm:$0x1]
    %v120 = vld [vmem:[#allocation2 + $0x112] sm:$0x1]
    %v121 = vld [vmem:[#allocation2 + $0x122] sm:$0x1]
    %v122 = vld [vmem:[#allocation2 + $0x132] sm:$0x1]
    %v123 = vld [vmem:[#allocation2 + $0x142] sm:$0x1]
    %v124 = vld [vmem:[#allocation2 + $0x152] sm:$0x1]
    %v125 = vld [vmem:[#allocation2 + $0x162] sm:$0x1]
    %v126 = vld [vmem:[#allocation2 + $0x172] sm:$0x1]
    %v127 = vadd.f32 %v79, %v103
    %v128 = vadd.f32 %v80, %v104
    %v129 = vadd.f32 %v81, %v105
    %v130 = vadd.f32 %v82, %v106
    %v131 = vadd.f32 %v83, %v107
    %v132 = vadd.f32 %v84, %v108
    %v133 = vadd.f32 %v85, %v109
    %v134 = vadd.f32 %v86, %v110
    %v135 = vadd.f32 %v87, %v111
    %v136 = vadd.f32 %v88, %v112
    %v137 = vadd.f32 %v89, %v113
    %v138 = vadd.f32 %v90, %v114
    %v139 = vadd.f32 %v91, %v115
    %v140 = vadd.f32 %v92, %v116
    %v141 = vadd.f32 %v93, %v117
    %v142 = vadd.f32 %v94, %v118
    %v143 = vadd.f32 %v95, %v119
    %v144 = vadd.f32 %v96, %v120
    %v145 = vadd.f32 %v97, %v121
    %v146 = vadd.f32 %v98, %v122
    %v147 = vadd.f32 %v99, %v123
    %v148 = vadd.f32 %v100, %v124
    %v149 = vadd.f32 %v101, %v125
    %v150 = vadd.f32 %v102, %v126
    %v151 = vld [vmem:[#allocation2 + $0x3] sm:$0x1]
    %v152 = vld [vmem:[#allocation2 + $0x13] sm:$0x1]
    %v153 = vld [vmem:[#allocation2 + $0x23] sm:$0x1]
    %v154 = vld [vmem:[#allocation2 + $0x33] sm:$0x1]
    %v155 = vld [vmem:[#allocation2 + $0x43] sm:$0x1]
    %v156 = vld [vmem:[#allocation2 + $0x53] sm:$0x1]
    %v157 = vld [vmem:[#allocation2 + $0x63] sm:$0x1]
    %v158 = vld [vmem:[#allocation2 + $0x73] sm:$0x1]
    %v159 = vld [vmem:[#allocation2 + $0x83] sm:$0x1]
    %v160 = vld [vmem:[#allocation2 + $0x93] sm:$0x1]
    %v161 = vld [vmem:[#allocation2 + $0xa3] sm:$0x1]
    %v162 = vld [vmem:[#allocation2 + $0xb3] sm:$0x1]
    %v163 = vld [vmem:[#allocation2 + $0xc3] sm:$0x1]
    %v164 = vld [vmem:[#allocation2 + $0xd3] sm:$0x1]
    %v165 = vld [vmem:[#allocation2 + $0xe3] sm:$0x1]
    %v166 = vld [vmem:[#allocation2 + $0xf3] sm:$0x1]
    %v167 = vld [vmem:[#allocation2 + $0x103] sm:$0x1]
    %v168 = vld [vmem:[#allocation2 + $0x113] sm:$0x1]
    %v169 = vld [vmem:[#allocation2 + $0x123] sm:$0x1]
    %v170 = vld [vmem:[#allocation2 + $0x133] sm:$0x1]
    %v171 = vld [vmem:[#allocation2 + $0x143] sm:$0x1]
    %v172 = vld [vmem:[#allocation2 + $0x153] sm:$0x1]
    %v173 = vld [vmem:[#allocation2 + $0x163] sm:$0x1]
    %v174 = vld [vmem:[#allocation2 + $0x173] sm:$0x1]
    %v175 = vadd.f32 %v127, %v151
    %v176 = vadd.f32 %v128, %v152
    %v177 = vadd.f32 %v129, %v153
    %v178 = vadd.f32 %v130, %v154
    %v179 = vadd.f32 %v131, %v155
    %v180 = vadd.f32 %v132, %v156
    %v181 = vadd.f32 %v133, %v157
    %v182 = vadd.f32 %v134, %v158
    %v183 = vadd.f32 %v135, %v159
    %v184 = vadd.f32 %v136, %v160
    %v185 = vadd.f32 %v137, %v161
    %v186 = vadd.f32 %v138, %v162
    %v187 = vadd.f32 %v139, %v163
    %v188 = vadd.f32 %v140, %v164
    %v189 = vadd.f32 %v141, %v165
    %v190 = vadd.f32 %v142, %v166
    %v191 = vadd.f32 %v143, %v167
    %v192 = vadd.f32 %v144, %v168
    %v193 = vadd.f32 %v145, %v169
    %v194 = vadd.f32 %v146, %v170
    %v195 = vadd.f32 %v147, %v171
    %v196 = vadd.f32 %v148, %v172
    %v197 = vadd.f32 %v149, %v173
    %v198 = vadd.f32 %v150, %v174
    %v199 = vld [vmem:[#allocation2 + $0x4] sm:$0x1]
    %v200 = vld [vmem:[#allocation2 + $0x14] sm:$0x1]
    %v201 = vld [vmem:[#allocation2 + $0x24] sm:$0x1]
    %v202 = vld [vmem:[#allocation2 + $0x34] sm:$0x1]
    %v203 = vld [vmem:[#allocation2 + $0x44] sm:$0x1]
    %v204 = vld [vmem:[#allocation2 + $0x54] sm:$0x1]
    %v205 = vld [vmem:[#allocation2 + $0x64] sm:$0x1]
    %v206 = vld [vmem:[#allocation2 + $0x74] sm:$0x1]
    %v207 = vld [vmem:[#allocation2 + $0x84] sm:$0x1]
    %v208 = vld [vmem:[#allocation2 + $0x94] sm:$0x1]
    %v209 = vld [vmem:[#allocation2 + $0xa4] sm:$0x1]
    %v210 = vld [vmem:[#allocation2 + $0xb4] sm:$0x1]
    %v211 = vld [vmem:[#allocation2 + $0xc4] sm:$0x1]
    %v212 = vld [vmem:[#allocation2 + $0xd4] sm:$0x1]
    %v213 = vld [vmem:[#allocation2 + $0xe4] sm:$0x1]
    %v214 = vld [vmem:[#allocation2 + $0xf4] sm:$0x1]
    %v215 = vld [vmem:[#allocation2 + $0x104] sm:$0x1]
    %v216 = vld [vmem:[#allocation2 + $0x114] sm:$0x1]
    %v217 = vld [vmem:[#allocation2 + $0x124] sm:$0x1]
    %v218 = vld [vmem:[#allocation2 + $0x134] sm:$0x1]
    %v219 = vld [vmem:[#allocation2 + $0x144] sm:$0x1]
    %v220 = vld [vmem:[#allocation2 + $0x154] sm:$0x1]
    %v221 = vld [vmem:[#allocation2 + $0x164] sm:$0x1]
    %v222 = vld [vmem:[#allocation2 + $0x174] sm:$0x1]
    %v223 = vadd.f32 %v175, %v199
    %v224 = vadd.f32 %v176, %v200
    %v225 = vadd.f32 %v177, %v201
    %v226 = vadd.f32 %v178, %v202
    %v227 = vadd.f32 %v179, %v203
    %v228 = vadd.f32 %v180, %v204
    %v229 = vadd.f32 %v181, %v205
    %v230 = vadd.f32 %v182, %v206
    %v231 = vadd.f32 %v183, %v207
    %v232 = vadd.f32 %v184, %v208
    %v233 = vadd.f32 %v185, %v209
    %v234 = vadd.f32 %v186, %v210
    %v235 = vadd.f32 %v187, %v211
    %v236 = vadd.f32 %v188, %v212
    %v237 = vadd.f32 %v189, %v213
    %v238 = vadd.f32 %v190, %v214
    %v239 = vadd.f32 %v191, %v215
    %v240 = vadd.f32 %v192, %v216
    %v241 = vadd.f32 %v193, %v217
    %v242 = vadd.f32 %v194, %v218
    %v243 = vadd.f32 %v195, %v219
    %v244 = vadd.f32 %v196, %v220
    %v245 = vadd.f32 %v197, %v221
    %v246 = vadd.f32 %v198, %v222
    %v247 = vld [vmem:[#allocation2 + $0x5] sm:$0x1]
    %v248 = vld [vmem:[#allocation2 + $0x15] sm:$0x1]
    %v249 = vld [vmem:[#allocation2 + $0x25] sm:$0x1]
    %v250 = vld [vmem:[#allocation2 + $0x35] sm:$0x1]
    %v251 = vld [vmem:[#allocation2 + $0x45] sm:$0x1]
    %v252 = vld [vmem:[#allocation2 + $0x55] sm:$0x1]
    %v253 = vld [vmem:[#allocation2 + $0x65] sm:$0x1]
    %v254 = vld [vmem:[#allocation2 + $0x75] sm:$0x1]
    %v255 = vld [vmem:[#allocation2 + $0x85] sm:$0x1]
    %v256 = vld [vmem:[#allocation2 + $0x95] sm:$0x1]
    %v257 = vld [vmem:[#allocation2 + $0xa5] sm:$0x1]
    %v258 = vld [vmem:[#allocation2 + $0xb5] sm:$0x1]
    %v259 = vld [vmem:[#allocation2 + $0xc5] sm:$0x1]
    %v260 = vld [vmem:[#allocation2 + $0xd5] sm:$0x1]
    %v261 = vld [vmem:[#allocation2 + $0xe5] sm:$0x1]
    %v262 = vld [vmem:[#allocation2 + $0xf5] sm:$0x1]
    %v263 = vld [vmem:[#allocation2 + $0x105] sm:$0x1]
    %v264 = vld [vmem:[#allocation2 + $0x115] sm:$0x1]
    %v265 = vld [vmem:[#allocation2 + $0x125] sm:$0x1]
    %v266 = vld [vmem:[#allocation2 + $0x135] sm:$0x1]
    %v267 = vld [vmem:[#allocation2 + $0x145] sm:$0x1]
    %v268 = vld [vmem:[#allocation2 + $0x155] sm:$0x1]
    %v269 = vld [vmem:[#allocation2 + $0x165] sm:$0x1]
    %v270 = vld [vmem:[#allocation2 + $0x175] sm:$0x1]
    %v271 = vadd.f32 %v223, %v247
    %v272 = vadd.f32 %v224, %v248
    %v273 = vadd.f32 %v225, %v249
    %v274 = vadd.f32 %v226, %v250
    %v275 = vadd.f32 %v227, %v251
    %v276 = vadd.f32 %v228, %v252
    %v277 = vadd.f32 %v229, %v253
    %v278 = vadd.f32 %v230, %v254
    %v279 = vadd.f32 %v231, %v255
    %v280 = vadd.f32 %v232, %v256
    %v281 = vadd.f32 %v233, %v257
    %v282 = vadd.f32 %v234, %v258
    %v283 = vadd.f32 %v235, %v259
    %v284 = vadd.f32 %v236, %v260
    %v285 = vadd.f32 %v237, %v261
    %v286 = vadd.f32 %v238, %v262
    %v287 = vadd.f32 %v239, %v263
    %v288 = vadd.f32 %v240, %v264
    %v289 = vadd.f32 %v241, %v265
    %v290 = vadd.f32 %v242, %v266
    %v291 = vadd.f32 %v243, %v267
    %v292 = vadd.f32 %v244, %v268
    %v293 = vadd.f32 %v245, %v269
    %v294 = vadd.f32 %v246, %v270
    %v295 = vld [vmem:[#allocation2 + $0x6] sm:$0x1]
    %v296 = vld [vmem:[#allocation2 + $0x16] sm:$0x1]
    %v297 = vld [vmem:[#allocation2 + $0x26] sm:$0x1]
    %v298 = vld [vmem:[#allocation2 + $0x36] sm:$0x1]
    %v299 = vld [vmem:[#allocation2 + $0x46] sm:$0x1]
    %v300 = vld [vmem:[#allocation2 + $0x56] sm:$0x1]
    %v301 = vld [vmem:[#allocation2 + $0x66] sm:$0x1]
    %v302 = vld [vmem:[#allocation2 + $0x76] sm:$0x1]
    %v303 = vld [vmem:[#allocation2 + $0x86] sm:$0x1]
    %v304 = vld [vmem:[#allocation2 + $0x96] sm:$0x1]
    %v305 = vld [vmem:[#allocation2 + $0xa6] sm:$0x1]
    %v306 = vld [vmem:[#allocation2 + $0xb6] sm:$0x1]
    %v307 = vld [vmem:[#allocation2 + $0xc6] sm:$0x1]
    %v308 = vld [vmem:[#allocation2 + $0xd6] sm:$0x1]
    %v309 = vld [vmem:[#allocation2 + $0xe6] sm:$0x1]
    %v310 = vld [vmem:[#allocation2 + $0xf6] sm:$0x1]
    %v311 = vld [vmem:[#allocation2 + $0x106] sm:$0x1]
    %v312 = vld [vmem:[#allocation2 + $0x116] sm:$0x1]
    %v313 = vld [vmem:[#allocation2 + $0x126] sm:$0x1]
    %v314 = vld [vmem:[#allocation2 + $0x136] sm:$0x1]
    %v315 = vld [vmem:[#allocation2 + $0x146] sm:$0x1]
    %v316 = vld [vmem:[#allocation2 + $0x156] sm:$0x1]
    %v317 = vld [vmem:[#allocation2 + $0x166] sm:$0x1]
    %v318 = vld [vmem:[#allocation2 + $0x176] sm:$0x1]
    %v319 = vadd.f32 %v271, %v295
    %v320 = vadd.f32 %v272, %v296
    %v321 = vadd.f32 %v273, %v297
    %v322 = vadd.f32 %v274, %v298
    %v323 = vadd.f32 %v275, %v299
    %v324 = vadd.f32 %v276, %v300
    %v325 = vadd.f32 %v277, %v301
    %v326 = vadd.f32 %v278, %v302
    %v327 = vadd.f32 %v279, %v303
    %v328 = vadd.f32 %v280, %v304
    %v329 = vadd.f32 %v281, %v305
    %v330 = vadd.f32 %v282, %v306
    %v331 = vadd.f32 %v283, %v307
    %v332 = vadd.f32 %v284, %v308
    %v333 = vadd.f32 %v285, %v309
    %v334 = vadd.f32 %v286, %v310
    %v335 = vadd.f32 %v287, %v311
    %v336 = vadd.f32 %v288, %v312
    %v337 = vadd.f32 %v289, %v313
    %v338 = vadd.f32 %v290, %v314
    %v339 = vadd.f32 %v291, %v315
    %v340 = vadd.f32 %v292, %v316
    %v341 = vadd.f32 %v293, %v317
    %v342 = vadd.f32 %v294, %v318
    %v343 = vld [vmem:[#allocation2 + $0x7] sm:$0x1]
    %v344 = vld [vmem:[#allocation2 + $0x17] sm:$0x1]
    %v345 = vld [vmem:[#allocation2 + $0x27] sm:$0x1]
    %v346 = vld [vmem:[#allocation2 + $0x37] sm:$0x1]
    %v347 = vld [vmem:[#allocation2 + $0x47] sm:$0x1]
    %v348 = vld [vmem:[#allocation2 + $0x57] sm:$0x1]
    %v349 = vld [vmem:[#allocation2 + $0x67] sm:$0x1]
    %v350 = vld [vmem:[#allocation2 + $0x77] sm:$0x1]
    %v351 = vld [vmem:[#allocation2 + $0x87] sm:$0x1]
    %v352 = vld [vmem:[#allocation2 + $0x97] sm:$0x1]
    %v353 = vld [vmem:[#allocation2 + $0xa7] sm:$0x1]
    %v354 = vld [vmem:[#allocation2 + $0xb7] sm:$0x1]
    %v355 = vld [vmem:[#allocation2 + $0xc7] sm:$0x1]
    %v356 = vld [vmem:[#allocation2 + $0xd7] sm:$0x1]
    %v357 = vld [vmem:[#allocation2 + $0xe7] sm:$0x1]
    %v358 = vld [vmem:[#allocation2 + $0xf7] sm:$0x1]
    %v359 = vld [vmem:[#allocation2 + $0x107] sm:$0x1]
    %v360 = vld [vmem:[#allocation2 + $0x117] sm:$0x1]
    %v361 = vld [vmem:[#allocation2 + $0x127] sm:$0x1]
    %v362 = vld [vmem:[#allocation2 + $0x137] sm:$0x1]
    %v363 = vld [vmem:[#allocation2 + $0x147] sm:$0x1]
    %v364 = vld [vmem:[#allocation2 + $0x157] sm:$0x1]
    %v365 = vld [vmem:[#allocation2 + $0x167] sm:$0x1]
    %v366 = vld [vmem:[#allocation2 + $0x177] sm:$0x1]
    %v367 = vadd.f32 %v319, %v343
    %v368 = vadd.f32 %v320, %v344
    %v369 = vadd.f32 %v321, %v345
    %v370 = vadd.f32 %v322, %v346
    %v371 = vadd.f32 %v323, %v347
    %v372 = vadd.f32 %v324, %v348
    %v373 = vadd.f32 %v325, %v349
    %v374 = vadd.f32 %v326, %v350
    %v375 = vadd.f32 %v327, %v351
    %v376 = vadd.f32 %v328, %v352
    %v377 = vadd.f32 %v329, %v353
    %v378 = vadd.f32 %v330, %v354
    %v379 = vadd.f32 %v331, %v355
    %v380 = vadd.f32 %v332, %v356
    %v381 = vadd.f32 %v333, %v357
    %v382 = vadd.f32 %v334, %v358
    %v383 = vadd.f32 %v335, %v359
    %v384 = vadd.f32 %v336, %v360
    %v385 = vadd.f32 %v337, %v361
    %v386 = vadd.f32 %v338, %v362
    %v387 = vadd.f32 %v339, %v363
    %v388 = vadd.f32 %v340, %v364
    %v389 = vadd.f32 %v341, %v365
    %v390 = vadd.f32 %v342, %v366
    %v391 = vld [vmem:[#allocation2 + $0x8] sm:$0x1]
    %v392 = vld [vmem:[#allocation2 + $0x18] sm:$0x1]
    %v393 = vld [vmem:[#allocation2 + $0x28] sm:$0x1]
    %v394 = vld [vmem:[#allocation2 + $0x38] sm:$0x1]
    %v395 = vld [vmem:[#allocation2 + $0x48] sm:$0x1]
    %v396 = vld [vmem:[#allocation2 + $0x58] sm:$0x1]
    %v397 = vld [vmem:[#allocation2 + $0x68] sm:$0x1]
    %v398 = vld [vmem:[#allocation2 + $0x78] sm:$0x1]
    %v399 = vld [vmem:[#allocation2 + $0x88] sm:$0x1]
    %v400 = vld [vmem:[#allocation2 + $0x98] sm:$0x1]
    %v401 = vld [vmem:[#allocation2 + $0xa8] sm:$0x1]
    %v402 = vld [vmem:[#allocation2 + $0xb8] sm:$0x1]
    %v403 = vld [vmem:[#allocation2 + $0xc8] sm:$0x1]
    %v404 = vld [vmem:[#allocation2 + $0xd8] sm:$0x1]
    %v405 = vld [vmem:[#allocation2 + $0xe8] sm:$0x1]
    %v406 = vld [vmem:[#allocation2 + $0xf8] sm:$0x1]
    %v407 = vld [vmem:[#allocation2 + $0x108] sm:$0x1]
    %v408 = vld [vmem:[#allocation2 + $0x118] sm:$0x1]
    %v409 = vld [vmem:[#allocation2 + $0x128] sm:$0x1]
    %v410 = vld [vmem:[#allocation2 + $0x138] sm:$0x1]
    %v411 = vld [vmem:[#allocation2 + $0x148] sm:$0x1]
    %v412 = vld [vmem:[#allocation2 + $0x158] sm:$0x1]
    %v413 = vld [vmem:[#allocation2 + $0x168] sm:$0x1]
    %v414 = vld [vmem:[#allocation2 + $0x178] sm:$0x1]
    %v415 = vadd.f32 %v367, %v391
    %v416 = vadd.f32 %v368, %v392
    %v417 = vadd.f32 %v369, %v393
    %v418 = vadd.f32 %v370, %v394
    %v419 = vadd.f32 %v371, %v395
    %v420 = vadd.f32 %v372, %v396
    %v421 = vadd.f32 %v373, %v397
    %v422 = vadd.f32 %v374, %v398
    %v423 = vadd.f32 %v375, %v399
    %v424 = vadd.f32 %v376, %v400
    %v425 = vadd.f32 %v377, %v401
    %v426 = vadd.f32 %v378, %v402
    %v427 = vadd.f32 %v379, %v403
    %v428 = vadd.f32 %v380, %v404
    %v429 = vadd.f32 %v381, %v405
    %v430 = vadd.f32 %v382, %v406
    %v431 = vadd.f32 %v383, %v407
    %v432 = vadd.f32 %v384, %v408
    %v433 = vadd.f32 %v385, %v409
    %v434 = vadd.f32 %v386, %v410
    %v435 = vadd.f32 %v387, %v411
    %v436 = vadd.f32 %v388, %v412
    %v437 = vadd.f32 %v389, %v413
    %v438 = vadd.f32 %v390, %v414
    %v439 = vld [vmem:[#allocation2 + $0x9] sm:$0x1]
    %v440 = vld [vmem:[#allocation2 + $0x19] sm:$0x1]
    %v441 = vld [vmem:[#allocation2 + $0x29] sm:$0x1]
    %v442 = vld [vmem:[#allocation2 + $0x39] sm:$0x1]
    %v443 = vld [vmem:[#allocation2 + $0x49] sm:$0x1]
    %v444 = vld [vmem:[#allocation2 + $0x59] sm:$0x1]
    %v445 = vld [vmem:[#allocation2 + $0x69] sm:$0x1]
    %v446 = vld [vmem:[#allocation2 + $0x79] sm:$0x1]
    %v447 = vld [vmem:[#allocation2 + $0x89] sm:$0x1]
    %v448 = vld [vmem:[#allocation2 + $0x99] sm:$0x1]
    %v449 = vld [vmem:[#allocation2 + $0xa9] sm:$0x1]
    %v450 = vld [vmem:[#allocation2 + $0xb9] sm:$0x1]
    %v451 = vld [vmem:[#allocation2 + $0xc9] sm:$0x1]
    %v452 = vld [vmem:[#allocation2 + $0xd9] sm:$0x1]
    %v453 = vld [vmem:[#allocation2 + $0xe9] sm:$0x1]
    %v454 = vld [vmem:[#allocation2 + $0xf9] sm:$0x1]
    %v455 = vld [vmem:[#allocation2 + $0x109] sm:$0x1]
    %v456 = vld [vmem:[#allocation2 + $0x119] sm:$0x1]
    %v457 = vld [vmem:[#allocation2 + $0x129] sm:$0x1]
    %v458 = vld [vmem:[#allocation2 + $0x139] sm:$0x1]
    %v459 = vld [vmem:[#allocation2 + $0x149] sm:$0x1]
    %v460 = vld [vmem:[#allocation2 + $0x159] sm:$0x1]
    %v461 = vld [vmem:[#allocation2 + $0x169] sm:$0x1]
    %v462 = vld [vmem:[#allocation2 + $0x179] sm:$0x1]
    %v463 = vadd.f32 %v415, %v439
    %v464 = vadd.f32 %v416, %v440
    %v465 = vadd.f32 %v417, %v441
    %v466 = vadd.f32 %v418, %v442
    %v467 = vadd.f32 %v419, %v443
    %v468 = vadd.f32 %v420, %v444
    %v469 = vadd.f32 %v421, %v445
    %v470 = vadd.f32 %v422, %v446
    %v471 = vadd.f32 %v423, %v447
    %v472 = vadd.f32 %v424, %v448
    %v473 = vadd.f32 %v425, %v449
    %v474 = vadd.f32 %v426, %v450
    %v475 = vadd.f32 %v427, %v451
    %v476 = vadd.f32 %v428, %v452
    %v477 = vadd.f32 %v429, %v453
    %v478 = vadd.f32 %v430, %v454
    %v479 = vadd.f32 %v431, %v455
    %v480 = vadd.f32 %v432, %v456
    %v481 = vadd.f32 %v433, %v457
    %v482 = vadd.f32 %v434, %v458
    %v483 = vadd.f32 %v435, %v459
    %v484 = vadd.f32 %v436, %v460
    %v485 = vadd.f32 %v437, %v461
    %v486 = vadd.f32 %v438, %v462
    %v487 = vld [vmem:[#allocation2 + $0xa] sm:$0x1]
    %v488 = vld [vmem:[#allocation2 + $0x1a] sm:$0x1]
    %v489 = vld [vmem:[#allocation2 + $0x2a] sm:$0x1]
    %v490 = vld [vmem:[#allocation2 + $0x3a] sm:$0x1]
    %v491 = vld [vmem:[#allocation2 + $0x4a] sm:$0x1]
    %v492 = vld [vmem:[#allocation2 + $0x5a] sm:$0x1]
    %v493 = vld [vmem:[#allocation2 + $0x6a] sm:$0x1]
    %v494 = vld [vmem:[#allocation2 + $0x7a] sm:$0x1]
    %v495 = vld [vmem:[#allocation2 + $0x8a] sm:$0x1]
    %v496 = vld [vmem:[#allocation2 + $0x9a] sm:$0x1]
    %v497 = vld [vmem:[#allocation2 + $0xaa] sm:$0x1]
    %v498 = vld [vmem:[#allocation2 + $0xba] sm:$0x1]
    %v499 = vld [vmem:[#allocation2 + $0xca] sm:$0x1]
    %v500 = vld [vmem:[#allocation2 + $0xda] sm:$0x1]
    %v501 = vld [vmem:[#allocation2 + $0xea] sm:$0x1]
    %v502 = vld [vmem:[#allocation2 + $0xfa] sm:$0x1]
    %v503 = vld [vmem:[#allocation2 + $0x10a] sm:$0x1]
    %v504 = vld [vmem:[#allocation2 + $0x11a] sm:$0x1]
    %v505 = vld [vmem:[#allocation2 + $0x12a] sm:$0x1]
    %v506 = vld [vmem:[#allocation2 + $0x13a] sm:$0x1]
    %v507 = vld [vmem:[#allocation2 + $0x14a] sm:$0x1]
    %v508 = vld [vmem:[#allocation2 + $0x15a] sm:$0x1]
    %v509 = vld [vmem:[#allocation2 + $0x16a] sm:$0x1]
    %v510 = vld [vmem:[#allocation2 + $0x17a] sm:$0x1]
    %v511 = vadd.f32 %v463, %v487
    %v512 = vadd.f32 %v464, %v488
    %v513 = vadd.f32 %v465, %v489
    %v514 = vadd.f32 %v466, %v490
    %v515 = vadd.f32 %v467, %v491
    %v516 = vadd.f32 %v468, %v492
    %v517 = vadd.f32 %v469, %v493
    %v518 = vadd.f32 %v470, %v494
    %v519 = vadd.f32 %v471, %v495
    %v520 = vadd.f32 %v472, %v496
    %v521 = vadd.f32 %v473, %v497
    %v522 = vadd.f32 %v474, %v498
    %v523 = vadd.f32 %v475, %v499
    %v524 = vadd.f32 %v476, %v500
    %v525 = vadd.f32 %v477, %v501
    %v526 = vadd.f32 %v478, %v502
    %v527 = vadd.f32 %v479, %v503
    %v528 = vadd.f32 %v480, %v504
    %v529 = vadd.f32 %v481, %v505
    %v530 = vadd.f32 %v482, %v506
    %v531 = vadd.f32 %v483, %v507
    %v532 = vadd.f32 %v484, %v508
    %v533 = vadd.f32 %v485, %v509
    %v534 = vadd.f32 %v486, %v510
    %v535 = vld [vmem:[#allocation2 + $0xb] sm:$0x1]
    %v536 = vld [vmem:[#allocation2 + $0x1b] sm:$0x1]
    %v537 = vld [vmem:[#allocation2 + $0x2b] sm:$0x1]
    %v538 = vld [vmem:[#allocation2 + $0x3b] sm:$0x1]
    %v539 = vld [vmem:[#allocation2 + $0x4b] sm:$0x1]
    %v540 = vld [vmem:[#allocation2 + $0x5b] sm:$0x1]
    %v541 = vld [vmem:[#allocation2 + $0x6b] sm:$0x1]
    %v542 = vld [vmem:[#allocation2 + $0x7b] sm:$0x1]
    %v543 = vld [vmem:[#allocation2 + $0x8b] sm:$0x1]
    %v544 = vld [vmem:[#allocation2 + $0x9b] sm:$0x1]
    %v545 = vld [vmem:[#allocation2 + $0xab] sm:$0x1]
    %v546 = vld [vmem:[#allocation2 + $0xbb] sm:$0x1]
    %v547 = vld [vmem:[#allocation2 + $0xcb] sm:$0x1]
    %v548 = vld [vmem:[#allocation2 + $0xdb] sm:$0x1]
    %v549 = vld [vmem:[#allocation2 + $0xeb] sm:$0x1]
    %v550 = vld [vmem:[#allocation2 + $0xfb] sm:$0x1]
    %v551 = vld [vmem:[#allocation2 + $0x10b] sm:$0x1]
    %v552 = vld [vmem:[#allocation2 + $0x11b] sm:$0x1]
    %v553 = vld [vmem:[#allocation2 + $0x12b] sm:$0x1]
    %v554 = vld [vmem:[#allocation2 + $0x13b] sm:$0x1]
    %v555 = vld [vmem:[#allocation2 + $0x14b] sm:$0x1]
    %v556 = vld [vmem:[#allocation2 + $0x15b] sm:$0x1]
    %v557 = vld [vmem:[#allocation2 + $0x16b] sm:$0x1]
    %v558 = vld [vmem:[#allocation2 + $0x17b] sm:$0x1]
    %v559 = vadd.f32 %v511, %v535
    %v560 = vadd.f32 %v512, %v536
    %v561 = vadd.f32 %v513, %v537
    %v562 = vadd.f32 %v514, %v538
    %v563 = vadd.f32 %v515, %v539
    %v564 = vadd.f32 %v516, %v540
    %v565 = vadd.f32 %v517, %v541
    %v566 = vadd.f32 %v518, %v542
    %v567 = vadd.f32 %v519, %v543
    %v568 = vadd.f32 %v520, %v544
    %v569 = vadd.f32 %v521, %v545
    %v570 = vadd.f32 %v522, %v546
    %v571 = vadd.f32 %v523, %v547
    %v572 = vadd.f32 %v524, %v548
    %v573 = vadd.f32 %v525, %v549
    %v574 = vadd.f32 %v526, %v550
    %v575 = vadd.f32 %v527, %v551
    %v576 = vadd.f32 %v528, %v552
    %v577 = vadd.f32 %v529, %v553
    %v578 = vadd.f32 %v530, %v554
    %v579 = vadd.f32 %v531, %v555
    %v580 = vadd.f32 %v532, %v556
    %v581 = vadd.f32 %v533, %v557
    %v582 = vadd.f32 %v534, %v558
    %v583 = vld [vmem:[#allocation2 + $0xc] sm:$0x1]
    %v584 = vld [vmem:[#allocation2 + $0x1c] sm:$0x1]
    %v585 = vld [vmem:[#allocation2 + $0x2c] sm:$0x1]
    %v586 = vld [vmem:[#allocation2 + $0x3c] sm:$0x1]
    %v587 = vld [vmem:[#allocation2 + $0x4c] sm:$0x1]
    %v588 = vld [vmem:[#allocation2 + $0x5c] sm:$0x1]
    %v589 = vld [vmem:[#allocation2 + $0x6c] sm:$0x1]
    %v590 = vld [vmem:[#allocation2 + $0x7c] sm:$0x1]
    %v591 = vld [vmem:[#allocation2 + $0x8c] sm:$0x1]
    %v592 = vld [vmem:[#allocation2 + $0x9c] sm:$0x1]
    %v593 = vld [vmem:[#allocation2 + $0xac] sm:$0x1]
    %v594 = vld [vmem:[#allocation2 + $0xbc] sm:$0x1]
    %v595 = vld [vmem:[#allocation2 + $0xcc] sm:$0x1]
    %v596 = vld [vmem:[#allocation2 + $0xdc] sm:$0x1]
    %v597 = vld [vmem:[#allocation2 + $0xec] sm:$0x1]
    %v598 = vld [vmem:[#allocation2 + $0xfc] sm:$0x1]
    %v599 = vld [vmem:[#allocation2 + $0x10c] sm:$0x1]
    %v600 = vld [vmem:[#allocation2 + $0x11c] sm:$0x1]
    %v601 = vld [vmem:[#allocation2 + $0x12c] sm:$0x1]
    %v602 = vld [vmem:[#allocation2 + $0x13c] sm:$0x1]
    %v603 = vld [vmem:[#allocation2 + $0x14c] sm:$0x1]
    %v604 = vld [vmem:[#allocation2 + $0x15c] sm:$0x1]
    %v605 = vld [vmem:[#allocation2 + $0x16c] sm:$0x1]
    %v606 = vld [vmem:[#allocation2 + $0x17c] sm:$0x1]
    %v607 = vadd.f32 %v559, %v583
    %v608 = vadd.f32 %v560, %v584
    %v609 = vadd.f32 %v561, %v585
    %v610 = vadd.f32 %v562, %v586
    %v611 = vadd.f32 %v563, %v587
    %v612 = vadd.f32 %v564, %v588
    %v613 = vadd.f32 %v565, %v589
    %v614 = vadd.f32 %v566, %v590
    %v615 = vadd.f32 %v567, %v591
    %v616 = vadd.f32 %v568, %v592
    %v617 = vadd.f32 %v569, %v593
    %v618 = vadd.f32 %v570, %v594
    %v619 = vadd.f32 %v571, %v595
    %v620 = vadd.f32 %v572, %v596
    %v621 = vadd.f32 %v573, %v597
    %v622 = vadd.f32 %v574, %v598
    %v623 = vadd.f32 %v575, %v599
    %v624 = vadd.f32 %v576, %v600
    %v625 = vadd.f32 %v577, %v601
    %v626 = vadd.f32 %v578, %v602
    %v627 = vadd.f32 %v579, %v603
    %v628 = vadd.f32 %v580, %v604
    %v629 = vadd.f32 %v581, %v605
    %v630 = vadd.f32 %v582, %v606
    %v631 = vld [vmem:[#allocation2 + $0xd] sm:$0x1]
    %v632 = vld [vmem:[#allocation2 + $0x1d] sm:$0x1]
    %v633 = vld [vmem:[#allocation2 + $0x2d] sm:$0x1]
    %v634 = vld [vmem:[#allocation2 + $0x3d] sm:$0x1]
    %v635 = vld [vmem:[#allocation2 + $0x4d] sm:$0x1]
    %v636 = vld [vmem:[#allocation2 + $0x5d] sm:$0x1]
    %v637 = vld [vmem:[#allocation2 + $0x6d] sm:$0x1]
    %v638 = vld [vmem:[#allocation2 + $0x7d] sm:$0x1]
    %v639 = vld [vmem:[#allocation2 + $0x8d] sm:$0x1]
    %v640 = vld [vmem:[#allocation2 + $0x9d] sm:$0x1]
    %v641 = vld [vmem:[#allocation2 + $0xad] sm:$0x1]
    %v642 = vld [vmem:[#allocation2 + $0xbd] sm:$0x1]
    %v643 = vld [vmem:[#allocation2 + $0xcd] sm:$0x1]
    %v644 = vld [vmem:[#allocation2 + $0xdd] sm:$0x1]
    %v645 = vld [vmem:[#allocation2 + $0xed] sm:$0x1]
    %v646 = vld [vmem:[#allocation2 + $0xfd] sm:$0x1]
    %v647 = vld [vmem:[#allocation2 + $0x10d] sm:$0x1]
    %v648 = vld [vmem:[#allocation2 + $0x11d] sm:$0x1]
    %v649 = vld [vmem:[#allocation2 + $0x12d] sm:$0x1]
    %v650 = vld [vmem:[#allocation2 + $0x13d] sm:$0x1]
    %v651 = vld [vmem:[#allocation2 + $0x14d] sm:$0x1]
    %v652 = vld [vmem:[#allocation2 + $0x15d] sm:$0x1]
    %v653 = vld [vmem:[#allocation2 + $0x16d] sm:$0x1]
    %v654 = vld [vmem:[#allocation2 + $0x17d] sm:$0x1]
    %v655 = vadd.f32 %v607, %v631
    %v656 = vadd.f32 %v608, %v632
    %v657 = vadd.f32 %v609, %v633
    %v658 = vadd.f32 %v610, %v634
    %v659 = vadd.f32 %v611, %v635
    %v660 = vadd.f32 %v612, %v636
    %v661 = vadd.f32 %v613, %v637
    %v662 = vadd.f32 %v614, %v638
    %v663 = vadd.f32 %v615, %v639
    %v664 = vadd.f32 %v616, %v640
    %v665 = vadd.f32 %v617, %v641
    %v666 = vadd.f32 %v618, %v642
    %v667 = vadd.f32 %v619, %v643
    %v668 = vadd.f32 %v620, %v644
    %v669 = vadd.f32 %v621, %v645
    %v670 = vadd.f32 %v622, %v646
    %v671 = vadd.f32 %v623, %v647
    %v672 = vadd.f32 %v624, %v648
    %v673 = vadd.f32 %v625, %v649
    %v674 = vadd.f32 %v626, %v650
    %v675 = vadd.f32 %v627, %v651
    %v676 = vadd.f32 %v628, %v652
    %v677 = vadd.f32 %v629, %v653
    %v678 = vadd.f32 %v630, %v654
    %v679 = vld [vmem:[#allocation2 + $0xe] sm:$0x1]
    %v680 = vld [vmem:[#allocation2 + $0x1e] sm:$0x1]
    %v681 = vld [vmem:[#allocation2 + $0x2e] sm:$0x1]
    %v682 = vld [vmem:[#allocation2 + $0x3e] sm:$0x1]
    %v683 = vld [vmem:[#allocation2 + $0x4e] sm:$0x1]
    %v684 = vld [vmem:[#allocation2 + $0x5e] sm:$0x1]
    %v685 = vld [vmem:[#allocation2 + $0x6e] sm:$0x1]
    %v686 = vld [vmem:[#allocation2 + $0x7e] sm:$0x1]
    %v687 = vld [vmem:[#allocation2 + $0x8e] sm:$0x1]
    %v688 = vld [vmem:[#allocation2 + $0x9e] sm:$0x1]
    %v689 = vld [vmem:[#allocation2 + $0xae] sm:$0x1]
    %v690 = vld [vmem:[#allocation2 + $0xbe] sm:$0x1]
    %v691 = vld [vmem:[#allocation2 + $0xce] sm:$0x1]
    %v692 = vld [vmem:[#allocation2 + $0xde] sm:$0x1]
    %v693 = vld [vmem:[#allocation2 + $0xee] sm:$0x1]
    %v694 = vld [vmem:[#allocation2 + $0xfe] sm:$0x1]
    %v695 = vld [vmem:[#allocation2 + $0x10e] sm:$0x1]
    %v696 = vld [vmem:[#allocation2 + $0x11e] sm:$0x1]
    %v697 = vld [vmem:[#allocation2 + $0x12e] sm:$0x1]
    %v698 = vld [vmem:[#allocation2 + $0x13e] sm:$0x1]
    %v699 = vld [vmem:[#allocation2 + $0x14e] sm:$0x1]
    %v700 = vld [vmem:[#allocation2 + $0x15e] sm:$0x1]
    %v701 = vld [vmem:[#allocation2 + $0x16e] sm:$0x1]
    %v702 = vld [vmem:[#allocation2 + $0x17e] sm:$0x1]
    %v703 = vadd.f32 %v655, %v679
    %v704 = vadd.f32 %v656, %v680
    %v705 = vadd.f32 %v657, %v681
    %v706 = vadd.f32 %v658, %v682
    %v707 = vadd.f32 %v659, %v683
    %v708 = vadd.f32 %v660, %v684
    %v709 = vadd.f32 %v661, %v685
    %v710 = vadd.f32 %v662, %v686
    %v711 = vadd.f32 %v663, %v687
    %v712 = vadd.f32 %v664, %v688
    %v713 = vadd.f32 %v665, %v689
    %v714 = vadd.f32 %v666, %v690
    %v715 = vadd.f32 %v667, %v691
    %v716 = vadd.f32 %v668, %v692
    %v717 = vadd.f32 %v669, %v693
    %v718 = vadd.f32 %v670, %v694
    %v719 = vadd.f32 %v671, %v695
    %v720 = vadd.f32 %v672, %v696
    %v721 = vadd.f32 %v673, %v697
    %v722 = vadd.f32 %v674, %v698
    %v723 = vadd.f32 %v675, %v699
    %v724 = vadd.f32 %v676, %v700
    %v725 = vadd.f32 %v677, %v701
    %v726 = vadd.f32 %v678, %v702
    %v727 = vld [vmem:[#allocation2 + $0xf] sm:$0x1]
    %v728 = vld [vmem:[#allocation2 + $0x1f] sm:$0x1]
    %v729 = vld [vmem:[#allocation2 + $0x2f] sm:$0x1]
    %v730 = vld [vmem:[#allocation2 + $0x3f] sm:$0x1]
    %v731 = vld [vmem:[#allocation2 + $0x4f] sm:$0x1]
    %v732 = vld [vmem:[#allocation2 + $0x5f] sm:$0x1]
    %v733 = vld [vmem:[#allocation2 + $0x6f] sm:$0x1]
    %v734 = vld [vmem:[#allocation2 + $0x7f] sm:$0x1]
    %v735 = vld [vmem:[#allocation2 + $0x8f] sm:$0x1]
    %v736 = vld [vmem:[#allocation2 + $0x9f] sm:$0x1]
    %v737 = vld [vmem:[#allocation2 + $0xaf] sm:$0x1]
    %v738 = vld [vmem:[#allocation2 + $0xbf] sm:$0x1]
    %v739 = vld [vmem:[#allocation2 + $0xcf] sm:$0x1]
    %v740 = vld [vmem:[#allocation2 + $0xdf] sm:$0x1]
    %v741 = vld [vmem:[#allocation2 + $0xef] sm:$0x1]
    %v742 = vld [vmem:[#allocation2 + $0xff] sm:$0x1]
    %v743 = vld [vmem:[#allocation2 + $0x10f] sm:$0x1]
    %v744 = vld [vmem:[#allocation2 + $0x11f] sm:$0x1]
    %v745 = vld [vmem:[#allocation2 + $0x12f] sm:$0x1]
    %v746 = vld [vmem:[#allocation2 + $0x13f] sm:$0x1]
    %v747 = vld [vmem:[#allocation2 + $0x14f] sm:$0x1]
    %v748 = vld [vmem:[#allocation2 + $0x15f] sm:$0x1]
    %v749 = vld [vmem:[#allocation2 + $0x16f] sm:$0x1]
    %v750 = vld [vmem:[#allocation2 + $0x17f] sm:$0x1]
    %v751 = vadd.f32 %v703, %v727
    %v752 = vadd.f32 %v704, %v728
    %v753 = vadd.f32 %v705, %v729
    %v754 = vadd.f32 %v706, %v730
    %v755 = vadd.f32 %v707, %v731
    %v756 = vadd.f32 %v708, %v732
    %v757 = vadd.f32 %v709, %v733
    %v758 = vadd.f32 %v710, %v734
    %v759 = vadd.f32 %v711, %v735
    %v760 = vadd.f32 %v712, %v736
    %v761 = vadd.f32 %v713, %v737
    %v762 = vadd.f32 %v714, %v738
    %v763 = vadd.f32 %v715, %v739
    %v764 = vadd.f32 %v716, %v740
    %v765 = vadd.f32 %v717, %v741
    %v766 = vadd.f32 %v718, %v742
    %v767 = vadd.f32 %v719, %v743
    %v768 = vadd.f32 %v720, %v744
    %v769 = vadd.f32 %v721, %v745
    %v770 = vadd.f32 %v722, %v746
    %v771 = vadd.f32 %v723, %v747
    %v772 = vadd.f32 %v724, %v748
    %v773 = vadd.f32 %v725, %v749
    %v774 = vadd.f32 %v726, %v750
    %v775 = vld [vmem:[%s1] sm:$0xff]
    %v776 = vld [vmem:[%s1 + $0x8] sm:$0xff]
    %v777 = vld [vmem:[%s1 + $0x10] sm:$0xff]
    %v778 = vld [vmem:[%s1 + $0x18] sm:$0xff]
    %v779 = vld [vmem:[%s1 + $0x20] sm:$0xff]
    %v780 = vld [vmem:[%s1 + $0x28] sm:$0xff]
    %v781 = vld [vmem:[%s1 + $0x30] sm:$0xff]
    %v782 = vld [vmem:[%s1 + $0x38] sm:$0xff]
    %v783 = vld [vmem:[%s1 + $0x40] sm:$0xff]
    %v784 = vld [vmem:[%s1 + $0x48] sm:$0xff]
    %v785 = vld [vmem:[%s1 + $0x50] sm:$0xff]
    %v786 = vld [vmem:[%s1 + $0x58] sm:$0xff]
    %v787 = vld [vmem:[%s1 + $0x60] sm:$0xff]
    %v788 = vld [vmem:[%s1 + $0x68] sm:$0xff]
    %v789 = vld [vmem:[%s1 + $0x70] sm:$0xff]
    %v790 = vld [vmem:[%s1 + $0x78] sm:$0xff]
    %v791 = vld [vmem:[%s2] sm:$0x1]
    %v793 = vperm.slane %v791, 0
    %v819 = vrot.slane %v752, 7
    %vm820 = vcmask 1041409
    %v821 = vsel %vm820, %v819, %v751
    %v822 = vrot.slane %v753, 6
    %vm823 = vcmask 1042434
    %v824 = vsel %vm823, %v822, %v821
    %v825 = vrot.slane %v754, 5
    %vm826 = vcmask 1043459
    %v827 = vsel %vm826, %v825, %v824
    %v828 = vrot.slane %v755, 4
    %vm829 = vcmask 1044484
    %v830 = vsel %vm829, %v828, %v827
    %v831 = vrot.slane %v756, 3
    %vm832 = vcmask 1045509
    %v833 = vsel %vm832, %v831, %v830
    %v834 = vrot.slane %v757, 2
    %vm835 = vcmask 1046534
    %v836 = vsel %vm835, %v834, %v833
    %v837 = vrot.slane %v758, 1
    %vm838 = vcmask 1047559
    %v839 = vsel %vm838, %v837, %v836
    %v840 = vrot.slane %v760, 7
    %v841 = vsel %vm820, %v840, %v759
    %v842 = vrot.slane %v761, 6
    %v843 = vsel %vm823, %v842, %v841
    %v844 = vrot.slane %v762, 5
    %v845 = vsel %vm826, %v844, %v843
    %v846 = vrot.slane %v763, 4
    %v847 = vsel %vm829, %v846, %v845
    %v848 = vrot.slane %v764, 3
    %v849 = vsel %vm832, %v848, %v847
    %v850 = vrot.slane %v765, 2
    %v851 = vsel %vm835, %v850, %v849
    %v852 = vrot.slane %v766, 1
    %v853 = vsel %vm838, %v852, %v851
    %v854 = vrot.slane %v768, 7
    %v855 = vsel %vm820, %v854, %v767
    %v856 = vrot.slane %v769, 6
    %v857 = vsel %vm823, %v856, %v855
    %v858 = vrot.slane %v770, 5
    %v859 = vsel %vm826, %v858, %v857
    %v860 = vrot.slane %v771, 4
    %v861 = vsel %vm829, %v860, %v859
    %v862 = vrot.slane %v772, 3
    %v863 = vsel %vm832, %v862, %v861
    %v864 = vrot.slane %v773, 2
    %v865 = vsel %vm835, %v864, %v863
    %v866 = vrot.slane %v774, 1
    %v867 = vsel %vm838, %v866, %v865
    %871 = vmatpush.msra.mxu0 %v790
    %872 = vmatpush.msra.mxu0 %v789
    %873 = vmatpush.msra.mxu0 %v788
    %874 = vmatpush.msra.mxu0 %v787
    %875 = vmatpush.msra.mxu0 %v786
    %876 = vmatpush.msra.mxu0 %v785
    %877 = vmatpush.msra.mxu0 %v784
    %878 = vmatpush.msra.mxu0 %v783
    %879 = vmatpush.msra.mxu0 %v782
    %880 = vmatpush.msra.mxu0 %v781
    %881 = vmatpush.msra.mxu0 %v780
    %882 = vmatpush.msra.mxu0 %v779
    %883 = vmatpush.msra.mxu0 %v778
    %884 = vmatpush.msra.mxu0 %v777
    %885 = vmatpush.msra.mxu0 %v776
    %886 = vmatpush.msra.mxu0 %v775
    %887 = vmatmul.f32.gmra.mxu0 %v839
    %v888 = vpop.f32.mrf.mxu0
    %v889 = vadd.f32 %v793, %v888
    %890 = vmatmul.f32.gmra.mxu0 %v853
    %v891 = vpop.f32.mrf.mxu0
    %v892 = vadd.f32 %v793, %v891
    %893 = vmatmul.f32.gmra.mxu0 %v867
    %v894 = vpop.f32.mrf.mxu0
    %v895 = vadd.f32 %v793, %v894
    %896 = vdwg.mxu0
    %vm897 = vcmask 130048
    %v898 = vsel %vm897, %v889, -inf
    %899 = vmax.xlane.f32.xlu0 %v898
    %v900 = vpop.xlane.xlu0 %899
    %v901 = vsel %vm897, %v892, -inf
    %902 = vmax.xlane.f32.xlu0 %v901
    %v903 = vpop.xlane.xlu0 %902
    %v904 = vsel %vm897, %v895, -inf
    %905 = vmax.xlane.f32.xlu0 %v904
    %v906 = vpop.xlane.xlu0 %905
    %v907 = vsub.f32 %v889, %v900
    %v908 = vsub.f32 %v892, %v903
    %v909 = vsub.f32 %v895, %v906
    %v910 = vmul.f32 %v907, 1.442695
    %v911 = vpow.pop %v910
    %v912 = vmul.f32 %v908, 1.442695
    %v913 = vpow.pop %v912
    %v914 = vmul.f32 %v909, 1.442695
    %v915 = vpow.pop %v914
    %v916 = vsel %vm897, %v911, 0.0
    %917 = vadd.xlane.f32.xlu0 %v916
    %v918 = vpop.xlane.xlu0 %917
    %v919 = vsel %vm897, %v913, 0.0
    %920 = vadd.xlane.f32.xlu0 %v919
    %v921 = vpop.xlane.xlu0 %920
    %v922 = vsel %vm897, %v915, 0.0
    %923 = vadd.xlane.f32.xlu0 %v922
    %v924 = vpop.xlane.xlu0 %923
    %v925 = vrcp.pop %v918
    %v926 = vrcp.pop %v921
    %v927 = vrcp.pop %v924
    %v928 = vmul.f32 %v911, %v925
    %v929 = vmul.f32 %v913, %v926
    %v930 = vmul.f32 %v915, %v927
    %932 = vset.pattern.permute.xlu0 0
    %933 = vperm.xlu0 %932, %v928
    %v934 = vpop.permute.xlu0 %933
    %937 = vset.pattern.permute.xlu0 0
    %938 = vperm.xlu0 %937, %v929
    %v939 = vpop.permute.xlu0 %938
    %942 = vset.pattern.permute.xlu0 0
    %943 = vperm.xlu0 %942, %v930
    %v944 = vpop.permute.xlu0 %943
    %v970 = vrot.slane %v32, 7
    %v971 = vsel %vm820, %v970, %v31
    %v972 = vrot.slane %v33, 6
    %v973 = vsel %vm823, %v972, %v971
    %v974 = vrot.slane %v34, 5
    %v975 = vsel %vm826, %v974, %v973
    %v976 = vrot.slane %v35, 4
    %v977 = vsel %vm829, %v976, %v975
    %v978 = vrot.slane %v36, 3
    %v979 = vsel %vm832, %v978, %v977
    %v980 = vrot.slane %v37, 2
    %v981 = vsel %vm835, %v980, %v979
    %v982 = vrot.slane %v38, 1
    %v983 = vsel %vm838, %v982, %v981
    %v984 = vrot.slane %v40, 7
    %v985 = vsel %vm820, %v984, %v39
    %v986 = vrot.slane %v41, 6
    %v987 = vsel %vm823, %v986, %v985
    %v988 = vrot.slane %v42, 5
    %v989 = vsel %vm826, %v988, %v987
    %v990 = vrot.slane %v43, 4
    %v991 = vsel %vm829, %v990, %v989
    %v992 = vrot.slane %v44, 3
    %v993 = vsel %vm832, %v992, %v991
    %v994 = vrot.slane %v45, 2
    %v995 = vsel %vm835, %v994, %v993
    %v996 = vrot.slane %v46, 1
    %v997 = vsel %vm838, %v996, %v995
    %v998 = vrot.slane %v48, 7
    %v999 = vsel %vm820, %v998, %v47
    %v1000 = vrot.slane %v49, 6
    %v1001 = vsel %vm823, %v1000, %v999
    %v1002 = vrot.slane %v50, 5
    %v1003 = vsel %vm826, %v1002, %v1001
    %v1004 = vrot.slane %v51, 4
    %v1005 = vsel %vm829, %v1004, %v1003
    %v1006 = vrot.slane %v52, 3
    %v1007 = vsel %vm832, %v1006, %v1005
    %v1008 = vrot.slane %v53, 2
    %v1009 = vsel %vm835, %v1008, %v1007
    %v1010 = vrot.slane %v54, 1
    %v1011 = vsel %vm838, %v1010, %v1009
    %v1015 = vmul.f32 %v934, %v983
    %v1016 = vmul.f32 %v939, %v997
    %v1017 = vmul.f32 %v944, %v1011
    %1018 = vset.pattern.permute.xlu0 1
    %1019 = vperm.xlu0 %1018, %v928
    %v1020 = vpop.permute.xlu0 %1019
    %1022 = vset.pattern.permute.xlu0 1
    %1023 = vperm.xlu0 %1022, %v929
    %v1024 = vpop.permute.xlu0 %1023
    %1026 = vset.pattern.permute.xlu0 1
    %1027 = vperm.xlu0 %1026, %v930
    %v1028 = vpop.permute.xlu0 %1027
    %v1054 = vrot.slane %v56, 7
    %v1055 = vsel %vm820, %v1054, %v55
    %v1056 = vrot.slane %v57, 6
    %v1057 = vsel %vm823, %v1056, %v1055
    %v1058 = vrot.slane %v58, 5
    %v1059 = vsel %vm826, %v1058, %v1057
    %v1060 = vrot.slane %v59, 4
    %v1061 = vsel %vm829, %v1060, %v1059
    %v1062 = vrot.slane %v60, 3
    %v1063 = vsel %vm832, %v1062, %v1061
    %v1064 = vrot.slane %v61, 2
    %v1065 = vsel %vm835, %v1064, %v1063
    %v1066 = vrot.slane %v62, 1
    %v1067 = vsel %vm838, %v1066, %v1065
    %v1068 = vrot.slane %v64, 7
    %v1069 = vsel %vm820, %v1068, %v63
    %v1070 = vrot.slane %v65, 6
    %v1071 = vsel %vm823, %v1070, %v1069
    %v1072 = vrot.slane %v66, 5
    %v1073 = vsel %vm826, %v1072, %v1071
    %v1074 = vrot.slane %v67, 4
    %v1075 = vsel %vm829, %v1074, %v1073
    %v1076 = vrot.slane %v68, 3
    %v1077 = vsel %vm832, %v1076, %v1075
    %v1078 = vrot.slane %v69, 2
    %v1079 = vsel %vm835, %v1078, %v1077
    %v1080 = vrot.slane %v70, 1
    %v1081 = vsel %vm838, %v1080, %v1079
    %v1082 = vrot.slane %v72, 7
    %v1083 = vsel %vm820, %v1082, %v71
    %v1084 = vrot.slane %v73, 6
    %v1085 = vsel %vm823, %v1084, %v1083
    %v1086 = vrot.slane %v74, 5
    %v1087 = vsel %vm826, %v1086, %v1085
    %v1088 = vrot.slane %v75, 4
    %v1089 = vsel %vm829, %v1088, %v1087
    %v1090 = vrot.slane %v76, 3
    %v1091 = vsel %vm832, %v1090, %v1089
    %v1092 = vrot.slane %v77, 2
    %v1093 = vsel %vm835, %v1092, %v1091
    %v1094 = vrot.slane %v78, 1
    %v1095 = vsel %vm838, %v1094, %v1093
    %v1099 = vmul.f32 %v1020, %v1067
    %v1100 = vmul.f32 %v1024, %v1081
    %v1101 = vmul.f32 %v1028, %v1095
    %v1102 = vadd.f32 %v1015, %v1099
    %v1103 = vadd.f32 %v1016, %v1100
    %v1104 = vadd.f32 %v1017, %v1101
    %1105 = vset.pattern.permute.xlu0 2
    %1106 = vperm.xlu0 %1105, %v928
    %v1107 = vpop.permute.xlu0 %1106
    %1109 = vset.pattern.permute.xlu0 2
    %1110 = vperm.xlu0 %1109, %v929
    %v1111 = vpop.permute.xlu0 %1110
    %1113 = vset.pattern.permute.xlu0 2
    %1114 = vperm.xlu0 %1113, %v930
    %v1115 = vpop.permute.xlu0 %1114
    %v1141 = vrot.slane %v104, 7
    %v1142 = vsel %vm820, %v1141, %v103
    %v1143 = vrot.slane %v105, 6
    %v1144 = vsel %vm823, %v1143, %v1142
    %v1145 = vrot.slane %v106, 5
    %v1146 = vsel %vm826, %v1145, %v1144
    %v1147 = vrot.slane %v107, 4
    %v1148 = vsel %vm829, %v1147, %v1146
    %v1149 = vrot.slane %v108, 3
    %v1150 = vsel %vm832, %v1149, %v1148
    %v1151 = vrot.slane %v109, 2
    %v1152 = vsel %vm835, %v1151, %v1150
    %v1153 = vrot.slane %v110, 1
    %v1154 = vsel %vm838, %v1153, %v1152
    %v1155 = vrot.slane %v112, 7
    %v1156 = vsel %vm820, %v1155, %v111
    %v1157 = vrot.slane %v113, 6
    %v1158 = vsel %vm823, %v1157, %v1156
    %v1159 = vrot.slane %v114, 5
    %v1160 = vsel %vm826, %v1159, %v1158
    %v1161 = vrot.slane %v115, 4
    %v1162 = vsel %vm829, %v1161, %v1160
    %v1163 = vrot.slane %v116, 3
    %v1164 = vsel %vm832, %v1163, %v1162
    %v1165 = vrot.slane %v117, 2
    %v1166 = vsel %vm835, %v1165, %v1164
    %v1167 = vrot.slane %v118, 1
    %v1168 = vsel %vm838, %v1167, %v1166
    %v1169 = vrot.slane %v120, 7
    %v1170 = vsel %vm820, %v1169, %v119
    %v1171 = vrot.slane %v121, 6
    %v1172 = vsel %vm823, %v1171, %v1170
    %v1173 = vrot.slane %v122, 5
    %v1174 = vsel %vm826, %v1173, %v1172
    %v1175 = vrot.slane %v123, 4
    %v1176 = vsel %vm829, %v1175, %v1174
    %v1177 = vrot.slane %v124, 3
    %v1178 = vsel %vm832, %v1177, %v1176
    %v1179 = vrot.slane %v125, 2
    %v1180 = vsel %vm835, %v1179, %v1178
    %v1181 = vrot.slane %v126, 1
    %v1182 = vsel %vm838, %v1181, %v1180
    %v1186 = vmul.f32 %v1107, %v1154
    %v1187 = vmul.f32 %v1111, %v1168
    %v1188 = vmul.f32 %v1115, %v1182
    %v1189 = vadd.f32 %v1102, %v1186
    %v1190 = vadd.f32 %v1103, %v1187
    %v1191 = vadd.f32 %v1104, %v1188
    %1192 = vset.pattern.permute.xlu0 3
    %1193 = vperm.xlu0 %1192, %v928
    %v1194 = vpop.permute.xlu0 %1193
    %1196 = vset.pattern.permute.xlu0 3
    %1197 = vperm.xlu0 %1196, %v929
    %v1198 = vpop.permute.xlu0 %1197
    %1200 = vset.pattern.permute.xlu0 3
    %1201 = vperm.xlu0 %1200, %v930
    %v1202 = vpop.permute.xlu0 %1201
    %v1228 = vrot.slane %v152, 7
    %v1229 = vsel %vm820, %v1228, %v151
    %v1230 = vrot.slane %v153, 6
    %v1231 = vsel %vm823, %v1230, %v1229
    %v1232 = vrot.slane %v154, 5
    %v1233 = vsel %vm826, %v1232, %v1231
    %v1234 = vrot.slane %v155, 4
    %v1235 = vsel %vm829, %v1234, %v1233
    %v1236 = vrot.slane %v156, 3
    %v1237 = vsel %vm832, %v1236, %v1235
    %v1238 = vrot.slane %v157, 2
    %v1239 = vsel %vm835, %v1238, %v1237
    %v1240 = vrot.slane %v158, 1
    %v1241 = vsel %vm838, %v1240, %v1239
    %v1242 = vrot.slane %v160, 7
    %v1243 = vsel %vm820, %v1242, %v159
    %v1244 = vrot.slane %v161, 6
    %v1245 = vsel %vm823, %v1244, %v1243
    %v1246 = vrot.slane %v162, 5
    %v1247 = vsel %vm826, %v1246, %v1245
    %v1248 = vrot.slane %v163, 4
    %v1249 = vsel %vm829, %v1248, %v1247
    %v1250 = vrot.slane %v164, 3
    %v1251 = vsel %vm832, %v1250, %v1249
    %v1252 = vrot.slane %v165, 2
    %v1253 = vsel %vm835, %v1252, %v1251
    %v1254 = vrot.slane %v166, 1
    %v1255 = vsel %vm838, %v1254, %v1253
    %v1256 = vrot.slane %v168, 7
    %v1257 = vsel %vm820, %v1256, %v167
    %v1258 = vrot.slane %v169, 6
    %v1259 = vsel %vm823, %v1258, %v1257
    %v1260 = vrot.slane %v170, 5
    %v1261 = vsel %vm826, %v1260, %v1259
    %v1262 = vrot.slane %v171, 4
    %v1263 = vsel %vm829, %v1262, %v1261
    %v1264 = vrot.slane %v172, 3
    %v1265 = vsel %vm832, %v1264, %v1263
    %v1266 = vrot.slane %v173, 2
    %v1267 = vsel %vm835, %v1266, %v1265
    %v1268 = vrot.slane %v174, 1
    %v1269 = vsel %vm838, %v1268, %v1267
    %v1273 = vmul.f32 %v1194, %v1241
    %v1274 = vmul.f32 %v1198, %v1255
    %v1275 = vmul.f32 %v1202, %v1269
    %v1276 = vadd.f32 %v1189, %v1273
    %v1277 = vadd.f32 %v1190, %v1274
    %v1278 = vadd.f32 %v1191, %v1275
    %1279 = vset.pattern.permute.xlu0 4
    %1280 = vperm.xlu0 %1279, %v928
    %v1281 = vpop.permute.xlu0 %1280
    %1283 = vset.pattern.permute.xlu0 4
    %1284 = vperm.xlu0 %1283, %v929
    %v1285 = vpop.permute.xlu0 %1284
    %1287 = vset.pattern.permute.xlu0 4
    %1288 = vperm.xlu0 %1287, %v930
    %v1289 = vpop.permute.xlu0 %1288
    %v1315 = vrot.slane %v200, 7
    %v1316 = vsel %vm820, %v1315, %v199
    %v1317 = vrot.slane %v201, 6
    %v1318 = vsel %vm823, %v1317, %v1316
    %v1319 = vrot.slane %v202, 5
    %v1320 = vsel %vm826, %v1319, %v1318
    %v1321 = vrot.slane %v203, 4
    %v1322 = vsel %vm829, %v1321, %v1320
    %v1323 = vrot.slane %v204, 3
    %v1324 = vsel %vm832, %v1323, %v1322
    %v1325 = vrot.slane %v205, 2
    %v1326 = vsel %vm835, %v1325, %v1324
    %v1327 = vrot.slane %v206, 1
    %v1328 = vsel %vm838, %v1327, %v1326
    %v1329 = vrot.slane %v208, 7
    %v1330 = vsel %vm820, %v1329, %v207
    %v1331 = vrot.slane %v209, 6
    %v1332 = vsel %vm823, %v1331, %v1330
    %v1333 = vrot.slane %v210, 5
    %v1334 = vsel %vm826, %v1333, %v1332
    %v1335 = vrot.slane %v211, 4
    %v1336 = vsel %vm829, %v1335, %v1334
    %v1337 = vrot.slane %v212, 3
    %v1338 = vsel %vm832, %v1337, %v1336
    %v1339 = vrot.slane %v213, 2
    %v1340 = vsel %vm835, %v1339, %v1338
    %v1341 = vrot.slane %v214, 1
    %v1342 = vsel %vm838, %v1341, %v1340
    %v1343 = vrot.slane %v216, 7
    %v1344 = vsel %vm820, %v1343, %v215
    %v1345 = vrot.slane %v217, 6
    %v1346 = vsel %vm823, %v1345, %v1344
    %v1347 = vrot.slane %v218, 5
    %v1348 = vsel %vm826, %v1347, %v1346
    %v1349 = vrot.slane %v219, 4
    %v1350 = vsel %vm829, %v1349, %v1348
    %v1351 = vrot.slane %v220, 3
    %v1352 = vsel %vm832, %v1351, %v1350
    %v1353 = vrot.slane %v221, 2
    %v1354 = vsel %vm835, %v1353, %v1352
    %v1355 = vrot.slane %v222, 1
    %v1356 = vsel %vm838, %v1355, %v1354
    %v1360 = vmul.f32 %v1281, %v1328
    %v1361 = vmul.f32 %v1285, %v1342
    %v1362 = vmul.f32 %v1289, %v1356
    %v1363 = vadd.f32 %v1276, %v1360
    %v1364 = vadd.f32 %v1277, %v1361
    %v1365 = vadd.f32 %v1278, %v1362
    %1366 = vset.pattern.permute.xlu0 5
    %1367 = vperm.xlu0 %1366, %v928
    %v1368 = vpop.permute.xlu0 %1367
    %1370 = vset.pattern.permute.xlu0 5
    %1371 = vperm.xlu0 %1370, %v929
    %v1372 = vpop.permute.xlu0 %1371
    %1374 = vset.pattern.permute.xlu0 5
    %1375 = vperm.xlu0 %1374, %v930
    %v1376 = vpop.permute.xlu0 %1375
    %v1402 = vrot.slane %v248, 7
    %v1403 = vsel %vm820, %v1402, %v247
    %v1404 = vrot.slane %v249, 6
    %v1405 = vsel %vm823, %v1404, %v1403
    %v1406 = vrot.slane %v250, 5
    %v1407 = vsel %vm826, %v1406, %v1405
    %v1408 = vrot.slane %v251, 4
    %v1409 = vsel %vm829, %v1408, %v1407
    %v1410 = vrot.slane %v252, 3
    %v1411 = vsel %vm832, %v1410, %v1409
    %v1412 = vrot.slane %v253, 2
    %v1413 = vsel %vm835, %v1412, %v1411
    %v1414 = vrot.slane %v254, 1
    %v1415 = vsel %vm838, %v1414, %v1413
    %v1416 = vrot.slane %v256, 7
    %v1417 = vsel %vm820, %v1416, %v255
    %v1418 = vrot.slane %v257, 6
    %v1419 = vsel %vm823, %v1418, %v1417
    %v1420 = vrot.slane %v258, 5
    %v1421 = vsel %vm826, %v1420, %v1419
    %v1422 = vrot.slane %v259, 4
    %v1423 = vsel %vm829, %v1422, %v1421
    %v1424 = vrot.slane %v260, 3
    %v1425 = vsel %vm832, %v1424, %v1423
    %v1426 = vrot.slane %v261, 2
    %v1427 = vsel %vm835, %v1426, %v1425
    %v1428 = vrot.slane %v262, 1
    %v1429 = vsel %vm838, %v1428, %v1427
    %v1430 = vrot.slane %v264, 7
    %v1431 = vsel %vm820, %v1430, %v263
    %v1432 = vrot.slane %v265, 6
    %v1433 = vsel %vm823, %v1432, %v1431
    %v1434 = vrot.slane %v266, 5
    %v1435 = vsel %vm826, %v1434, %v1433
    %v1436 = vrot.slane %v267, 4
    %v1437 = vsel %vm829, %v1436, %v1435
    %v1438 = vrot.slane %v268, 3
    %v1439 = vsel %vm832, %v1438, %v1437
    %v1440 = vrot.slane %v269, 2
    %v1441 = vsel %vm835, %v1440, %v1439
    %v1442 = vrot.slane %v270, 1
    %v1443 = vsel %vm838, %v1442, %v1441
    %v1447 = vmul.f32 %v1368, %v1415
    %v1448 = vmul.f32 %v1372, %v1429
    %v1449 = vmul.f32 %v1376, %v1443
    %v1450 = vadd.f32 %v1363, %v1447
    %v1451 = vadd.f32 %v1364, %v1448
    %v1452 = vadd.f32 %v1365, %v1449
    %1453 = vset.pattern.permute.xlu0 6
    %1454 = vperm.xlu0 %1453, %v928
    %v1455 = vpop.permute.xlu0 %1454
    %1457 = vset.pattern.permute.xlu0 6
    %1458 = vperm.xlu0 %1457, %v929
    %v1459 = vpop.permute.xlu0 %1458
    %1461 = vset.pattern.permute.xlu0 6
    %1462 = vperm.xlu0 %1461, %v930
    %v1463 = vpop.permute.xlu0 %1462
    %v1489 = vrot.slane %v296, 7
    %v1490 = vsel %vm820, %v1489, %v295
    %v1491 = vrot.slane %v297, 6
    %v1492 = vsel %vm823, %v1491, %v1490
    %v1493 = vrot.slane %v298, 5
    %v1494 = vsel %vm826, %v1493, %v1492
    %v1495 = vrot.slane %v299, 4
    %v1496 = vsel %vm829, %v1495, %v1494
    %v1497 = vrot.slane %v300, 3
    %v1498 = vsel %vm832, %v1497, %v1496
    %v1499 = vrot.slane %v301, 2
    %v1500 = vsel %vm835, %v1499, %v1498
    %v1501 = vrot.slane %v302, 1
    %v1502 = vsel %vm838, %v1501, %v1500
    %v1503 = vrot.slane %v304, 7
    %v1504 = vsel %vm820, %v1503, %v303
    %v1505 = vrot.slane %v305, 6
    %v1506 = vsel %vm823, %v1505, %v1504
    %v1507 = vrot.slane %v306, 5
    %v1508 = vsel %vm826, %v1507, %v1506
    %v1509 = vrot.slane %v307, 4
    %v1510 = vsel %vm829, %v1509, %v1508
    %v1511 = vrot.slane %v308, 3
    %v1512 = vsel %vm832, %v1511, %v1510
    %v1513 = vrot.slane %v309, 2
    %v1514 = vsel %vm835, %v1513, %v1512
    %v1515 = vrot.slane %v310, 1
    %v1516 = vsel %vm838, %v1515, %v1514
    %v1517 = vrot.slane %v312, 7
    %v1518 = vsel %vm820, %v1517, %v311
    %v1519 = vrot.slane %v313, 6
    %v1520 = vsel %vm823, %v1519, %v1518
    %v1521 = vrot.slane %v314, 5
    %v1522 = vsel %vm826, %v1521, %v1520
    %v1523 = vrot.slane %v315, 4
    %v1524 = vsel %vm829, %v1523, %v1522
    %v1525 = vrot.slane %v316, 3
    %v1526 = vsel %vm832, %v1525, %v1524
    %v1527 = vrot.slane %v317, 2
    %v1528 = vsel %vm835, %v1527, %v1526
    %v1529 = vrot.slane %v318, 1
    %v1530 = vsel %vm838, %v1529, %v1528
    %v1534 = vmul.f32 %v1455, %v1502
    %v1535 = vmul.f32 %v1459, %v1516
    %v1536 = vmul.f32 %v1463, %v1530
    %v1537 = vadd.f32 %v1450, %v1534
    %v1538 = vadd.f32 %v1451, %v1535
    %v1539 = vadd.f32 %v1452, %v1536
    %1540 = vset.pattern.permute.xlu0 7
    %1541 = vperm.xlu0 %1540, %v928
    %v1542 = vpop.permute.xlu0 %1541
    %1544 = vset.pattern.permute.xlu0 7
    %1545 = vperm.xlu0 %1544, %v929
    %v1546 = vpop.permute.xlu0 %1545
    %1548 = vset.pattern.permute.xlu0 7
    %1549 = vperm.xlu0 %1548, %v930
    %v1550 = vpop.permute.xlu0 %1549
    %v1576 = vrot.slane %v344, 7
    %v1577 = vsel %vm820, %v1576, %v343
    %v1578 = vrot.slane %v345, 6
    %v1579 = vsel %vm823, %v1578, %v1577
    %v1580 = vrot.slane %v346, 5
    %v1581 = vsel %vm826, %v1580, %v1579
    %v1582 = vrot.slane %v347, 4
    %v1583 = vsel %vm829, %v1582, %v1581
    %v1584 = vrot.slane %v348, 3
    %v1585 = vsel %vm832, %v1584, %v1583
    %v1586 = vrot.slane %v349, 2
    %v1587 = vsel %vm835, %v1586, %v1585
    %v1588 = vrot.slane %v350, 1
    %v1589 = vsel %vm838, %v1588, %v1587
    %v1590 = vrot.slane %v352, 7
    %v1591 = vsel %vm820, %v1590, %v351
    %v1592 = vrot.slane %v353, 6
    %v1593 = vsel %vm823, %v1592, %v1591
    %v1594 = vrot.slane %v354, 5
    %v1595 = vsel %vm826, %v1594, %v1593
    %v1596 = vrot.slane %v355, 4
    %v1597 = vsel %vm829, %v1596, %v1595
    %v1598 = vrot.slane %v356, 3
    %v1599 = vsel %vm832, %v1598, %v1597
    %v1600 = vrot.slane %v357, 2
    %v1601 = vsel %vm835, %v1600, %v1599
    %v1602 = vrot.slane %v358, 1
    %v1603 = vsel %vm838, %v1602, %v1601
    %v1604 = vrot.slane %v360, 7
    %v1605 = vsel %vm820, %v1604, %v359
    %v1606 = vrot.slane %v361, 6
    %v1607 = vsel %vm823, %v1606, %v1605
    %v1608 = vrot.slane %v362, 5
    %v1609 = vsel %vm826, %v1608, %v1607
    %v1610 = vrot.slane %v363, 4
    %v1611 = vsel %vm829, %v1610, %v1609
    %v1612 = vrot.slane %v364, 3
    %v1613 = vsel %vm832, %v1612, %v1611
    %v1614 = vrot.slane %v365, 2
    %v1615 = vsel %vm835, %v1614, %v1613
    %v1616 = vrot.slane %v366, 1
    %v1617 = vsel %vm838, %v1616, %v1615
    %v1621 = vmul.f32 %v1542, %v1589
    %v1622 = vmul.f32 %v1546, %v1603
    %v1623 = vmul.f32 %v1550, %v1617
    %v1624 = vadd.f32 %v1537, %v1621
    %v1625 = vadd.f32 %v1538, %v1622
    %v1626 = vadd.f32 %v1539, %v1623
    %1627 = vset.pattern.permute.xlu0 8
    %1628 = vperm.xlu0 %1627, %v928
    %v1629 = vpop.permute.xlu0 %1628
    %1631 = vset.pattern.permute.xlu0 8
    %1632 = vperm.xlu0 %1631, %v929
    %v1633 = vpop.permute.xlu0 %1632
    %1635 = vset.pattern.permute.xlu0 8
    %1636 = vperm.xlu0 %1635, %v930
    %v1637 = vpop.permute.xlu0 %1636
    %v1663 = vrot.slane %v392, 7
    %v1664 = vsel %vm820, %v1663, %v391
    %v1665 = vrot.slane %v393, 6
    %v1666 = vsel %vm823, %v1665, %v1664
    %v1667 = vrot.slane %v394, 5
    %v1668 = vsel %vm826, %v1667, %v1666
    %v1669 = vrot.slane %v395, 4
    %v1670 = vsel %vm829, %v1669, %v1668
    %v1671 = vrot.slane %v396, 3
    %v1672 = vsel %vm832, %v1671, %v1670
    %v1673 = vrot.slane %v397, 2
    %v1674 = vsel %vm835, %v1673, %v1672
    %v1675 = vrot.slane %v398, 1
    %v1676 = vsel %vm838, %v1675, %v1674
    %v1677 = vrot.slane %v400, 7
    %v1678 = vsel %vm820, %v1677, %v399
    %v1679 = vrot.slane %v401, 6
    %v1680 = vsel %vm823, %v1679, %v1678
    %v1681 = vrot.slane %v402, 5
    %v1682 = vsel %vm826, %v1681, %v1680
    %v1683 = vrot.slane %v403, 4
    %v1684 = vsel %vm829, %v1683, %v1682
    %v1685 = vrot.slane %v404, 3
    %v1686 = vsel %vm832, %v1685, %v1684
    %v1687 = vrot.slane %v405, 2
    %v1688 = vsel %vm835, %v1687, %v1686
    %v1689 = vrot.slane %v406, 1
    %v1690 = vsel %vm838, %v1689, %v1688
    %v1691 = vrot.slane %v408, 7
    %v1692 = vsel %vm820, %v1691, %v407
    %v1693 = vrot.slane %v409, 6
    %v1694 = vsel %vm823, %v1693, %v1692
    %v1695 = vrot.slane %v410, 5
    %v1696 = vsel %vm826, %v1695, %v1694
    %v1697 = vrot.slane %v411, 4
    %v1698 = vsel %vm829, %v1697, %v1696
    %v1699 = vrot.slane %v412, 3
    %v1700 = vsel %vm832, %v1699, %v1698
    %v1701 = vrot.slane %v413, 2
    %v1702 = vsel %vm835, %v1701, %v1700
    %v1703 = vrot.slane %v414, 1
    %v1704 = vsel %vm838, %v1703, %v1702
    %v1708 = vmul.f32 %v1629, %v1676
    %v1709 = vmul.f32 %v1633, %v1690
    %v1710 = vmul.f32 %v1637, %v1704
    %v1711 = vadd.f32 %v1624, %v1708
    %v1712 = vadd.f32 %v1625, %v1709
    %v1713 = vadd.f32 %v1626, %v1710
    %1714 = vset.pattern.permute.xlu0 9
    %1715 = vperm.xlu0 %1714, %v928
    %v1716 = vpop.permute.xlu0 %1715
    %1718 = vset.pattern.permute.xlu0 9
    %1719 = vperm.xlu0 %1718, %v929
    %v1720 = vpop.permute.xlu0 %1719
    %1722 = vset.pattern.permute.xlu0 9
    %1723 = vperm.xlu0 %1722, %v930
    %v1724 = vpop.permute.xlu0 %1723
    %v1750 = vrot.slane %v440, 7
    %v1751 = vsel %vm820, %v1750, %v439
    %v1752 = vrot.slane %v441, 6
    %v1753 = vsel %vm823, %v1752, %v1751
    %v1754 = vrot.slane %v442, 5
    %v1755 = vsel %vm826, %v1754, %v1753
    %v1756 = vrot.slane %v443, 4
    %v1757 = vsel %vm829, %v1756, %v1755
    %v1758 = vrot.slane %v444, 3
    %v1759 = vsel %vm832, %v1758, %v1757
    %v1760 = vrot.slane %v445, 2
    %v1761 = vsel %vm835, %v1760, %v1759
    %v1762 = vrot.slane %v446, 1
    %v1763 = vsel %vm838, %v1762, %v1761
    %v1764 = vrot.slane %v448, 7
    %v1765 = vsel %vm820, %v1764, %v447
    %v1766 = vrot.slane %v449, 6
    %v1767 = vsel %vm823, %v1766, %v1765
    %v1768 = vrot.slane %v450, 5
    %v1769 = vsel %vm826, %v1768, %v1767
    %v1770 = vrot.slane %v451, 4
    %v1771 = vsel %vm829, %v1770, %v1769
    %v1772 = vrot.slane %v452, 3
    %v1773 = vsel %vm832, %v1772, %v1771
    %v1774 = vrot.slane %v453, 2
    %v1775 = vsel %vm835, %v1774, %v1773
    %v1776 = vrot.slane %v454, 1
    %v1777 = vsel %vm838, %v1776, %v1775
    %v1778 = vrot.slane %v456, 7
    %v1779 = vsel %vm820, %v1778, %v455
    %v1780 = vrot.slane %v457, 6
    %v1781 = vsel %vm823, %v1780, %v1779
    %v1782 = vrot.slane %v458, 5
    %v1783 = vsel %vm826, %v1782, %v1781
    %v1784 = vrot.slane %v459, 4
    %v1785 = vsel %vm829, %v1784, %v1783
    %v1786 = vrot.slane %v460, 3
    %v1787 = vsel %vm832, %v1786, %v1785
    %v1788 = vrot.slane %v461, 2
    %v1789 = vsel %vm835, %v1788, %v1787
    %v1790 = vrot.slane %v462, 1
    %v1791 = vsel %vm838, %v1790, %v1789
    %v1795 = vmul.f32 %v1716, %v1763
    %v1796 = vmul.f32 %v1720, %v1777
    %v1797 = vmul.f32 %v1724, %v1791
    %v1798 = vadd.f32 %v1711, %v1795
    %v1799 = vadd.f32 %v1712, %v1796
    %v1800 = vadd.f32 %v1713, %v1797
    %1801 = vset.pattern.permute.xlu0 10
    %1802 = vperm.xlu0 %1801, %v928
    %v1803 = vpop.permute.xlu0 %1802
    %1805 = vset.pattern.permute.xlu0 10
    %1806 = vperm.xlu0 %1805, %v929
    %v1807 = vpop.permute.xlu0 %1806
    %1809 = vset.pattern.permute.xlu0 10
    %1810 = vperm.xlu0 %1809, %v930
    %v1811 = vpop.permute.xlu0 %1810
    %v1837 = vrot.slane %v488, 7
    %v1838 = vsel %vm820, %v1837, %v487
    %v1839 = vrot.slane %v489, 6
    %v1840 = vsel %vm823, %v1839, %v1838
    %v1841 = vrot.slane %v490, 5
    %v1842 = vsel %vm826, %v1841, %v1840
    %v1843 = vrot.slane %v491, 4
    %v1844 = vsel %vm829, %v1843, %v1842
    %v1845 = vrot.slane %v492, 3
    %v1846 = vsel %vm832, %v1845, %v1844
    %v1847 = vrot.slane %v493, 2
    %v1848 = vsel %vm835, %v1847, %v1846
    %v1849 = vrot.slane %v494, 1
    %v1850 = vsel %vm838, %v1849, %v1848
    %v1851 = vrot.slane %v496, 7
    %v1852 = vsel %vm820, %v1851, %v495
    %v1853 = vrot.slane %v497, 6
    %v1854 = vsel %vm823, %v1853, %v1852
    %v1855 = vrot.slane %v498, 5
    %v1856 = vsel %vm826, %v1855, %v1854
    %v1857 = vrot.slane %v499, 4
    %v1858 = vsel %vm829, %v1857, %v1856
    %v1859 = vrot.slane %v500, 3
    %v1860 = vsel %vm832, %v1859, %v1858
    %v1861 = vrot.slane %v501, 2
    %v1862 = vsel %vm835, %v1861, %v1860
    %v1863 = vrot.slane %v502, 1
    %v1864 = vsel %vm838, %v1863, %v1862
    %v1865 = vrot.slane %v504, 7
    %v1866 = vsel %vm820, %v1865, %v503
    %v1867 = vrot.slane %v505, 6
    %v1868 = vsel %vm823, %v1867, %v1866
    %v1869 = vrot.slane %v506, 5
    %v1870 = vsel %vm826, %v1869, %v1868
    %v1871 = vrot.slane %v507, 4
    %v1872 = vsel %vm829, %v1871, %v1870
    %v1873 = vrot.slane %v508, 3
    %v1874 = vsel %vm832, %v1873, %v1872
    %v1875 = vrot.slane %v509, 2
    %v1876 = vsel %vm835, %v1875, %v1874
    %v1877 = vrot.slane %v510, 1
    %v1878 = vsel %vm838, %v1877, %v1876
    %v1882 = vmul.f32 %v1803, %v1850
    %v1883 = vmul.f32 %v1807, %v1864
    %v1884 = vmul.f32 %v1811, %v1878
    %v1885 = vadd.f32 %v1798, %v1882
    %v1886 = vadd.f32 %v1799, %v1883
    %v1887 = vadd.f32 %v1800, %v1884
    %1888 = vset.pattern.permute.xlu0 11
    %1889 = vperm.xlu0 %1888, %v928
    %v1890 = vpop.permute.xlu0 %1889
    %1892 = vset.pattern.permute.xlu0 11
    %1893 = vperm.xlu0 %1892, %v929
    %v1894 = vpop.permute.xlu0 %1893
    %1896 = vset.pattern.permute.xlu0 11
    %1897 = vperm.xlu0 %1896, %v930
    %v1898 = vpop.permute.xlu0 %1897
    %v1924 = vrot.slane %v536, 7
    %v1925 = vsel %vm820, %v1924, %v535
    %v1926 = vrot.slane %v537, 6
    %v1927 = vsel %vm823, %v1926, %v1925
    %v1928 = vrot.slane %v538, 5
    %v1929 = vsel %vm826, %v1928, %v1927
    %v1930 = vrot.slane %v539, 4
    %v1931 = vsel %vm829, %v1930, %v1929
    %v1932 = vrot.slane %v540, 3
    %v1933 = vsel %vm832, %v1932, %v1931
    %v1934 = vrot.slane %v541, 2
    %v1935 = vsel %vm835, %v1934, %v1933
    %v1936 = vrot.slane %v542, 1
    %v1937 = vsel %vm838, %v1936, %v1935
    %v1938 = vrot.slane %v544, 7
    %v1939 = vsel %vm820, %v1938, %v543
    %v1940 = vrot.slane %v545, 6
    %v1941 = vsel %vm823, %v1940, %v1939
    %v1942 = vrot.slane %v546, 5
    %v1943 = vsel %vm826, %v1942, %v1941
    %v1944 = vrot.slane %v547, 4
    %v1945 = vsel %vm829, %v1944, %v1943
    %v1946 = vrot.slane %v548, 3
    %v1947 = vsel %vm832, %v1946, %v1945
    %v1948 = vrot.slane %v549, 2
    %v1949 = vsel %vm835, %v1948, %v1947
    %v1950 = vrot.slane %v550, 1
    %v1951 = vsel %vm838, %v1950, %v1949
    %v1952 = vrot.slane %v552, 7
    %v1953 = vsel %vm820, %v1952, %v551
    %v1954 = vrot.slane %v553, 6
    %v1955 = vsel %vm823, %v1954, %v1953
    %v1956 = vrot.slane %v554, 5
    %v1957 = vsel %vm826, %v1956, %v1955
    %v1958 = vrot.slane %v555, 4
    %v1959 = vsel %vm829, %v1958, %v1957
    %v1960 = vrot.slane %v556, 3
    %v1961 = vsel %vm832, %v1960, %v1959
    %v1962 = vrot.slane %v557, 2
    %v1963 = vsel %vm835, %v1962, %v1961
    %v1964 = vrot.slane %v558, 1
    %v1965 = vsel %vm838, %v1964, %v1963
    %v1969 = vmul.f32 %v1890, %v1937
    %v1970 = vmul.f32 %v1894, %v1951
    %v1971 = vmul.f32 %v1898, %v1965
    %v1972 = vadd.f32 %v1885, %v1969
    %v1973 = vadd.f32 %v1886, %v1970
    %v1974 = vadd.f32 %v1887, %v1971
    %1975 = vset.pattern.permute.xlu0 12
    %1976 = vperm.xlu0 %1975, %v928
    %v1977 = vpop.permute.xlu0 %1976
    %1979 = vset.pattern.permute.xlu0 12
    %1980 = vperm.xlu0 %1979, %v929
    %v1981 = vpop.permute.xlu0 %1980
    %1983 = vset.pattern.permute.xlu0 12
    %1984 = vperm.xlu0 %1983, %v930
    %v1985 = vpop.permute.xlu0 %1984
    %v2011 = vrot.slane %v584, 7
    %v2012 = vsel %vm820, %v2011, %v583
    %v2013 = vrot.slane %v585, 6
    %v2014 = vsel %vm823, %v2013, %v2012
    %v2015 = vrot.slane %v586, 5
    %v2016 = vsel %vm826, %v2015, %v2014
    %v2017 = vrot.slane %v587, 4
    %v2018 = vsel %vm829, %v2017, %v2016
    %v2019 = vrot.slane %v588, 3
    %v2020 = vsel %vm832, %v2019, %v2018
    %v2021 = vrot.slane %v589, 2
    %v2022 = vsel %vm835, %v2021, %v2020
    %v2023 = vrot.slane %v590, 1
    %v2024 = vsel %vm838, %v2023, %v2022
    %v2025 = vrot.slane %v592, 7
    %v2026 = vsel %vm820, %v2025, %v591
    %v2027 = vrot.slane %v593, 6
    %v2028 = vsel %vm823, %v2027, %v2026
    %v2029 = vrot.slane %v594, 5
    %v2030 = vsel %vm826, %v2029, %v2028
    %v2031 = vrot.slane %v595, 4
    %v2032 = vsel %vm829, %v2031, %v2030
    %v2033 = vrot.slane %v596, 3
    %v2034 = vsel %vm832, %v2033, %v2032
    %v2035 = vrot.slane %v597, 2
    %v2036 = vsel %vm835, %v2035, %v2034
    %v2037 = vrot.slane %v598, 1
    %v2038 = vsel %vm838, %v2037, %v2036
    %v2039 = vrot.slane %v600, 7
    %v2040 = vsel %vm820, %v2039, %v599
    %v2041 = vrot.slane %v601, 6
    %v2042 = vsel %vm823, %v2041, %v2040
    %v2043 = vrot.slane %v602, 5
    %v2044 = vsel %vm826, %v2043, %v2042
    %v2045 = vrot.slane %v603, 4
    %v2046 = vsel %vm829, %v2045, %v2044
    %v2047 = vrot.slane %v604, 3
    %v2048 = vsel %vm832, %v2047, %v2046
    %v2049 = vrot.slane %v605, 2
    %v2050 = vsel %vm835, %v2049, %v2048
    %v2051 = vrot.slane %v606, 1
    %v2052 = vsel %vm838, %v2051, %v2050
    %v2056 = vmul.f32 %v1977, %v2024
    %v2057 = vmul.f32 %v1981, %v2038
    %v2058 = vmul.f32 %v1985, %v2052
    %v2059 = vadd.f32 %v1972, %v2056
    %v2060 = vadd.f32 %v1973, %v2057
    %v2061 = vadd.f32 %v1974, %v2058
    %2062 = vset.pattern.permute.xlu0 13
    %2063 = vperm.xlu0 %2062, %v928
    %v2064 = vpop.permute.xlu0 %2063
    %2066 = vset.pattern.permute.xlu0 13
    %2067 = vperm.xlu0 %2066, %v929
    %v2068 = vpop.permute.xlu0 %2067
    %2070 = vset.pattern.permute.xlu0 13
    %2071 = vperm.xlu0 %2070, %v930
    %v2072 = vpop.permute.xlu0 %2071
    %v2098 = vrot.slane %v632, 7
    %v2099 = vsel %vm820, %v2098, %v631
    %v2100 = vrot.slane %v633, 6
    %v2101 = vsel %vm823, %v2100, %v2099
    %v2102 = vrot.slane %v634, 5
    %v2103 = vsel %vm826, %v2102, %v2101
    %v2104 = vrot.slane %v635, 4
    %v2105 = vsel %vm829, %v2104, %v2103
    %v2106 = vrot.slane %v636, 3
    %v2107 = vsel %vm832, %v2106, %v2105
    %v2108 = vrot.slane %v637, 2
    %v2109 = vsel %vm835, %v2108, %v2107
    %v2110 = vrot.slane %v638, 1
    %v2111 = vsel %vm838, %v2110, %v2109
    %v2112 = vrot.slane %v640, 7
    %v2113 = vsel %vm820, %v2112, %v639
    %v2114 = vrot.slane %v641, 6
    %v2115 = vsel %vm823, %v2114, %v2113
    %v2116 = vrot.slane %v642, 5
    %v2117 = vsel %vm826, %v2116, %v2115
    %v2118 = vrot.slane %v643, 4
    %v2119 = vsel %vm829, %v2118, %v2117
    %v2120 = vrot.slane %v644, 3
    %v2121 = vsel %vm832, %v2120, %v2119
    %v2122 = vrot.slane %v645, 2
    %v2123 = vsel %vm835, %v2122, %v2121
    %v2124 = vrot.slane %v646, 1
    %v2125 = vsel %vm838, %v2124, %v2123
    %v2126 = vrot.slane %v648, 7
    %v2127 = vsel %vm820, %v2126, %v647
    %v2128 = vrot.slane %v649, 6
    %v2129 = vsel %vm823, %v2128, %v2127
    %v2130 = vrot.slane %v650, 5
    %v2131 = vsel %vm826, %v2130, %v2129
    %v2132 = vrot.slane %v651, 4
    %v2133 = vsel %vm829, %v2132, %v2131
    %v2134 = vrot.slane %v652, 3
    %v2135 = vsel %vm832, %v2134, %v2133
    %v2136 = vrot.slane %v653, 2
    %v2137 = vsel %vm835, %v2136, %v2135
    %v2138 = vrot.slane %v654, 1
    %v2139 = vsel %vm838, %v2138, %v2137
    %v2143 = vmul.f32 %v2064, %v2111
    %v2144 = vmul.f32 %v2068, %v2125
    %v2145 = vmul.f32 %v2072, %v2139
    %v2146 = vadd.f32 %v2059, %v2143
    %v2147 = vadd.f32 %v2060, %v2144
    %v2148 = vadd.f32 %v2061, %v2145
    %2149 = vset.pattern.permute.xlu0 14
    %2150 = vperm.xlu0 %2149, %v928
    %v2151 = vpop.permute.xlu0 %2150
    %2153 = vset.pattern.permute.xlu0 14
    %2154 = vperm.xlu0 %2153, %v929
    %v2155 = vpop.permute.xlu0 %2154
    %2157 = vset.pattern.permute.xlu0 14
    %2158 = vperm.xlu0 %2157, %v930
    %v2159 = vpop.permute.xlu0 %2158
    %v2185 = vrot.slane %v680, 7
    %v2186 = vsel %vm820, %v2185, %v679
    %v2187 = vrot.slane %v681, 6
    %v2188 = vsel %vm823, %v2187, %v2186
    %v2189 = vrot.slane %v682, 5
    %v2190 = vsel %vm826, %v2189, %v2188
    %v2191 = vrot.slane %v683, 4
    %v2192 = vsel %vm829, %v2191, %v2190
    %v2193 = vrot.slane %v684, 3
    %v2194 = vsel %vm832, %v2193, %v2192
    %v2195 = vrot.slane %v685, 2
    %v2196 = vsel %vm835, %v2195, %v2194
    %v2197 = vrot.slane %v686, 1
    %v2198 = vsel %vm838, %v2197, %v2196
    %v2199 = vrot.slane %v688, 7
    %v2200 = vsel %vm820, %v2199, %v687
    %v2201 = vrot.slane %v689, 6
    %v2202 = vsel %vm823, %v2201, %v2200
    %v2203 = vrot.slane %v690, 5
    %v2204 = vsel %vm826, %v2203, %v2202
    %v2205 = vrot.slane %v691, 4
    %v2206 = vsel %vm829, %v2205, %v2204
    %v2207 = vrot.slane %v692, 3
    %v2208 = vsel %vm832, %v2207, %v2206
    %v2209 = vrot.slane %v693, 2
    %v2210 = vsel %vm835, %v2209, %v2208
    %v2211 = vrot.slane %v694, 1
    %v2212 = vsel %vm838, %v2211, %v2210
    %v2213 = vrot.slane %v696, 7
    %v2214 = vsel %vm820, %v2213, %v695
    %v2215 = vrot.slane %v697, 6
    %v2216 = vsel %vm823, %v2215, %v2214
    %v2217 = vrot.slane %v698, 5
    %v2218 = vsel %vm826, %v2217, %v2216
    %v2219 = vrot.slane %v699, 4
    %v2220 = vsel %vm829, %v2219, %v2218
    %v2221 = vrot.slane %v700, 3
    %v2222 = vsel %vm832, %v2221, %v2220
    %v2223 = vrot.slane %v701, 2
    %v2224 = vsel %vm835, %v2223, %v2222
    %v2225 = vrot.slane %v702, 1
    %v2226 = vsel %vm838, %v2225, %v2224
    %v2230 = vmul.f32 %v2151, %v2198
    %v2231 = vmul.f32 %v2155, %v2212
    %v2232 = vmul.f32 %v2159, %v2226
    %v2233 = vadd.f32 %v2146, %v2230
    %v2234 = vadd.f32 %v2147, %v2231
    %v2235 = vadd.f32 %v2148, %v2232
    %2236 = vset.pattern.permute.xlu0 15
    %2237 = vperm.xlu0 %2236, %v928
    %v2238 = vpop.permute.xlu0 %2237
    %2240 = vset.pattern.permute.xlu0 15
    %2241 = vperm.xlu0 %2240, %v929
    %v2242 = vpop.permute.xlu0 %2241
    %2244 = vset.pattern.permute.xlu0 15
    %2245 = vperm.xlu0 %2244, %v930
    %v2246 = vpop.permute.xlu0 %2245
    %v2272 = vrot.slane %v728, 7
    %v2273 = vsel %vm820, %v2272, %v727
    %v2274 = vrot.slane %v729, 6
    %v2275 = vsel %vm823, %v2274, %v2273
    %v2276 = vrot.slane %v730, 5
    %v2277 = vsel %vm826, %v2276, %v2275
    %v2278 = vrot.slane %v731, 4
    %v2279 = vsel %vm829, %v2278, %v2277
    %v2280 = vrot.slane %v732, 3
    %v2281 = vsel %vm832, %v2280, %v2279
    %v2282 = vrot.slane %v733, 2
    %v2283 = vsel %vm835, %v2282, %v2281
    %v2284 = vrot.slane %v734, 1
    %v2285 = vsel %vm838, %v2284, %v2283
    %v2286 = vrot.slane %v736, 7
    %v2287 = vsel %vm820, %v2286, %v735
    %v2288 = vrot.slane %v737, 6
    %v2289 = vsel %vm823, %v2288, %v2287
    %v2290 = vrot.slane %v738, 5
    %v2291 = vsel %vm826, %v2290, %v2289
    %v2292 = vrot.slane %v739, 4
    %v2293 = vsel %vm829, %v2292, %v2291
    %v2294 = vrot.slane %v740, 3
    %v2295 = vsel %vm832, %v2294, %v2293
    %v2296 = vrot.slane %v741, 2
    %v2297 = vsel %vm835, %v2296, %v2295
    %v2298 = vrot.slane %v742, 1
    %v2299 = vsel %vm838, %v2298, %v2297
    %v2300 = vrot.slane %v744, 7
    %v2301 = vsel %vm820, %v2300, %v743
    %v2302 = vrot.slane %v745, 6
    %v2303 = vsel %vm823, %v2302, %v2301
    %v2304 = vrot.slane %v746, 5
    %v2305 = vsel %vm826, %v2304, %v2303
    %v2306 = vrot.slane %v747, 4
    %v2307 = vsel %vm829, %v2306, %v2305
    %v2308 = vrot.slane %v748, 3
    %v2309 = vsel %vm832, %v2308, %v2307
    %v2310 = vrot.slane %v749, 2
    %v2311 = vsel %vm835, %v2310, %v2309
    %v2312 = vrot.slane %v750, 1
    %v2313 = vsel %vm838, %v2312, %v2311
    %v2317 = vmul.f32 %v2238, %v2285
    %v2318 = vmul.f32 %v2242, %v2299
    %v2319 = vmul.f32 %v2246, %v2313
    %v2320 = vadd.f32 %v2233, %v2317
    %v2321 = vadd.f32 %v2234, %v2318
    %v2322 = vadd.f32 %v2235, %v2319
    %2323 = vst [vmem:[#allocation5] sm:$0xff] %v2320
    %2324 = vst [vmem:[#allocation5 + $0x8] sm:$0xff] %v2321
    %2325 = vst [vmem:[#allocation5 + $0x10] sm:$0xff] %v2322
    // Predicated region
    $region18: #{tpu_custom_call.1} parent=1 // pred_check
      _
    $region19: #{tpu_custom_call.1} parent=1 // pred_check_branch
      %2327 = sbr.rel (0) target = $region21
    $region20: #{tpu_custom_call.1} parent=1 // pred_region
      %2329 = vsyncadd [#allocation4], 0
      %s2330 = sshll.u32 [#allocation5], 4
      %s2331 = int_to_ptr.vmem [resolvable:$true] %s2330
      %s2332 = sshll.u32 %s3, 4
      %s2333 = int_to_ptr.hbm [resolvable:$true] %s2332
      %2338 = dma.vmem_to_hbm [thread:$0]  %s2331, 384, %s2333, [#allocation4], 128, 128, 8
    $region21: #{tpu_custom_call.1} parent=1 // pred_fallthru
      _
    // Predicated region
    $region22: #{tpu_custom_call.1} parent=1 // pred_check
      _
    $region23: #{tpu_custom_call.1} parent=1 // pred_check_branch
      %2340 = sbr.rel (0) target = $region25
    $region24: #{tpu_custom_call.1} parent=1 // pred_region
      %2342 = dma.done [#allocation4], 384
    $region25: #{tpu_custom_call.1} parent=1 // pred_fallthru
      _
    %2343 = vsyncpa [#allocation3], 1
    %2344 = vsyncpa [#allocation4], 1

</llo_original>
